<compile_context>
chip_gen: v7x
topology: tpu7x:2x2x1
jax: 0.10.0
libtpu: 0.0.40
codegen_flags: <defaults>
</compile_context>

<pallas_src>
import math
import jax
import jax.numpy as jnp
from jax.experimental import pallas as pl
from jax.experimental.pallas import tpu as pltpu  # noqa: F401  (TPU-specific tuning hooks)

# ---- synthetic "config" (small BERT-like) --------------------------------
B, S, H = 2, 8, 32          # batch, seq, hidden
NUM_HEADS, HEAD_DIM = 4, 8  # H = NUM_HEADS * HEAD_DIM
INTER = 64                  # FFN intermediate size
N_LAYERS = 2
VOCAB = 64
LN_EPS = 1e-12
BS = B * S                  # batch folded into sublanes
HB = NUM_HEADS * BS         # heads folded onto sublanes for attention
SCALE = 1.0 / math.sqrt(HEAD_DIM)

# ---- slab layouts (compile-time row offsets) -------------------------------
W_LANES = 128                                  # bf16 weight slab lane width
L_W_ROWS = H + H + H + INTER                   # wqkv, wo, w1, w2 rows per layer
W_ROWS = VOCAB + N_LAYERS * L_W_ROWS


def _w_offsets(layer):
    base = VOCAB + layer * L_W_ROWS
    return dict(wqkv=base, wo=base + H, w1=base + 2 * H, w2=base + 3 * H)


VEC_LANES = 3 * H                              # f32 vector slab lane width (max = bqkv)
POSTYP_OFF = 0                                 # [BS, H] pos+type embedding rows
EMB_LN_OFF = BS                                # embedding LN gamma / beta rows
L_V_ROWS = 8                                   # bqkv, bo, ln1g, ln1b, b1, b2, ln2g, ln2b
VEC_L0 = BS + 2


def _v_offsets(layer):
    base = VEC_L0 + layer * L_V_ROWS
    return dict(bqkv=base, bo=base + 1, ln1g=base + 2, ln1b=base + 3,
                b1=base + 4, b2=base + 5, ln2g=base + 6, ln2b=base + 7)


TOPW_OFF = VEC_L0 + N_LAYERS * L_V_ROWS
TOPB_OFF = TOPW_OFF + 1
VEC_ROWS = TOPB_OFF + 1

DYN_W = max(VOCAB, HB)                         # dynamic slab lane width


# ---- helpers (pure jnp/lax: usable inside and outside kernels) ------------
def _layer_norm(x, gamma, beta):
    mu = jnp.mean(x, axis=-1, keepdims=True)
    var = jnp.mean((x - mu) ** 2, axis=-1, keepdims=True)
    return (x - mu) * jax.lax.rsqrt(var + LN_EPS) * gamma + beta


def _gelu(x):
    # tanh-approximate GELU (BERT uses erf-GELU; tanh approx keeps lowering simple)
    return 0.5 * x * (1.0 + jnp.tanh(0.7978845608028654 * (x + 0.044715 * x ** 3)))


def _softmax_recip(s):
    # kernel-only: EUP approximate reciprocal for the denominator
    s = s - jnp.max(s, axis=-1, keepdims=True)
    p = jnp.exp(s)
    return p * pl.reciprocal(jnp.sum(p, axis=-1, keepdims=True), approx=True)


# ---- the single fused Pallas kernel ----------------------------------------
def fused_forward_kernel(dyn_ref, w_ref, vec_ref, out_ref):
    f32, bf16 = jnp.float32, jnp.bfloat16

    # ---- dynamic slab (one DMA): one-hot ids + precomputed attention bias --
    onehot = dyn_ref[0:BS, 0:VOCAB].astype(bf16)                     # [BS, VOCAB]
    bias = dyn_ref[BS:BS + HB, 0:HB]                                 # [HB, HB] f32

    # ---- embeddings: one-hot MXU gather + (pos+type) + LayerNorm -----------
    x = jnp.dot(onehot, w_ref[0:VOCAB, 0:H], preferred_element_type=f32)
    x = x + vec_ref[POSTYP_OFF:POSTYP_OFF + BS, 0:H]
    x = _layer_norm(x, vec_ref[EMB_LN_OFF:EMB_LN_OFF + 1, 0:H],
                    vec_ref[EMB_LN_OFF + 1:EMB_LN_OFF + 2, 0:H])

    # ---- encoder layers (static unroll, weights resident in VMEM) ----------
    for l in range(N_LAYERS):
        wo_ = _w_offsets(l)
        vo_ = _v_offsets(l)

        # fused QKV projection (1/sqrt(HEAD_DIM) folded into Q columns at pack time)
        qkv = jnp.dot(x.astype(bf16), w_ref[wo_["wqkv"]:wo_["wqkv"] + H, 0:3 * H],
                      preferred_element_type=f32)
        qkv = qkv + vec_ref[vo_["bqkv"]:vo_["bqkv"] + 1, 0:3 * H]     # [BS, 3H]

        # fold heads onto the sublane axis: [BS, H] -> [NUM_HEADS*BS, HEAD_DIM]
        q_all = jnp.concatenate(
            [qkv[:, h * HEAD_DIM:(h + 1) * HEAD_DIM] for h in range(NUM_HEADS)], axis=0)
        k_all = jnp.concatenate(
            [qkv[:, H + h * HEAD_DIM:H + (h + 1) * HEAD_DIM] for h in range(NUM_HEADS)], axis=0)
        v_all = jnp.concatenate(
            [qkv[:, 2 * H + h * HEAD_DIM:2 * H + (h + 1) * HEAD_DIM] for h in range(NUM_HEADS)],
            axis=0)

        # ONE scores matmul, ONE softmax, ONE context matmul for ALL heads.
        # The additive bias masks cross-head, cross-batch and padded-key positions.
        s = jnp.dot(q_all.astype(bf16), k_all.T.astype(bf16),
                    preferred_element_type=f32) + bias                # [HB, HB]
        p = _softmax_recip(s)                                         # [HB, HB] f32
        ctx = jnp.dot(p.astype(bf16), v_all.astype(bf16),
                      preferred_element_type=f32)                     # [HB, HEAD_DIM]

        # unfold heads back onto the lane axis and do a single Wo matmul
        ctx_wide = jnp.concatenate(
            [ctx[h * BS:(h + 1) * BS, :] for h in range(NUM_HEADS)], axis=1)   # [BS, H]
        attn = jnp.dot(ctx_wide.astype(bf16), w_ref[wo_["wo"]:wo_["wo"] + H, 0:H],
                       preferred_element_type=f32)
        attn = attn + vec_ref[vo_["bo"]:vo_["bo"] + 1, 0:H]

        x = _layer_norm(x + attn, vec_ref[vo_["ln1g"]:vo_["ln1g"] + 1, 0:H],
                        vec_ref[vo_["ln1b"]:vo_["ln1b"] + 1, 0:H])

        hdn = jnp.dot(x.astype(bf16), w_ref[wo_["w1"]:wo_["w1"] + H, 0:INTER],
                      preferred_element_type=f32)
        hdn = _gelu(hdn + vec_ref[vo_["b1"]:vo_["b1"] + 1, 0:INTER])
        ffn = jnp.dot(hdn.astype(bf16), w_ref[wo_["w2"]:wo_["w2"] + INTER, 0:H],
                      preferred_element_type=f32)
        ffn = ffn + vec_ref[vo_["b2"]:vo_["b2"] + 1, 0:H]

        x = _layer_norm(x + ffn, vec_ref[vo_["ln2g"]:vo_["ln2g"] + 1, 0:H],
                        vec_ref[vo_["ln2b"]:vo_["ln2b"] + 1, 0:H])

    # ---- CLS head: VPU lane reduction + EXACT sigmoid (dropout = identity) --
    topw = vec_ref[TOPW_OFF:TOPW_OFF + 1, 0:H]                        # [1, H]
    topb = vec_ref[TOPB_OFF:TOPB_OFF + 1, 0:1]                        # [1, 1]
    logits = jnp.sum(x * topw, axis=-1, keepdims=True) + topb         # [BS, 1]
    out_ref[...] = 1.0 / (1.0 + jnp.exp(-logits))                     # exact sigmoid


# ---- wrapper: one pallas_call for the whole model ---------------------------
@jax.jit
def pairwise_forward(ids, mask, wslab, vslab):
    # dynamic slab built on the XLA side: one-hot tokens + head/batch/padding bias
    onehot = (ids.reshape(BS, 1).astype(jnp.int32) ==
              jnp.arange(VOCAB, dtype=jnp.int32)[None, :]).astype(jnp.float32)   # [BS, VOCAB]

    key_ok = jnp.tile(mask.reshape(BS) > 0, (NUM_HEADS,))                         # [HB]
    row = jnp.arange(HB, dtype=jnp.int32)[:, None]
    col = jnp.arange(HB, dtype=jnp.int32)[None, :]
    same_head = (row // BS) == (col // BS)
    same_batch = ((row % BS) // S) == ((col % BS) // S)
    valid = same_head & same_batch & key_ok[None, :]
    bias = jnp.where(valid, 0.0, -1e4).astype(jnp.float32)                        # [HB, HB]

    def pad_w(a):
        return jnp.pad(a, ((0, 0), (0, DYN_W - a.shape[1])))

    dyn = jnp.concatenate([pad_w(onehot), pad_w(bias)], axis=0)                   # [BS+HB, DYN_W]

    probs = pl.pallas_call(
        fused_forward_kernel,
        out_shape=jax.ShapeDtypeStruct((BS, 1), jnp.float32),
    )(dyn, wslab, vslab)
    # CLS rows (position 0 of each sequence) sliced out on the XLA side
    return probs.reshape(B, S)[:, 0:1]


# ---- one-time parameter packing: 2 contiguous slabs -------------------------
def pack_params(params):
    word_emb, pos_emb, type_emb, eg, eb = params["emb"]

    def pad_lanes(a, width):
        return jnp.pad(a, ((0, 0), (0, width - a.shape[1])))

    w_rows = [pad_lanes(word_emb, W_LANES)]
    v_rows = [pad_lanes(jnp.tile(pos_emb, (B, 1)) + type_emb[0:1, :], VEC_LANES),
              pad_lanes(eg, VEC_LANES), pad_lanes(eb, VEC_LANES)]

    for lp in params["layers"]:
        (wq, bq, wk, bk, wv, bv, wo, bo, g1, bg1, w1, b1, w2, b2, g2, bg2) = lp
        wqkv = jnp.concatenate([wq * SCALE, wk, wv], axis=1)   # scale folded into Q
        bqkv = jnp.concatenate([bq * SCALE, bk, bv], axis=1)
        w_rows += [pad_lanes(wqkv, W_LANES), pad_lanes(wo, W_LANES),
                   pad_lanes(w1, W_LANES), pad_lanes(w2, W_LANES)]
        v_rows += [pad_lanes(bqkv, VEC_LANES), pad_lanes(bo, VEC_LANES),
                   pad_lanes(g1, VEC_LANES), pad_lanes(bg1, VEC_LANES),
                   pad_lanes(b1, VEC_LANES), pad_lanes(b2, VEC_LANES),
                   pad_lanes(g2, VEC_LANES), pad_lanes(bg2, VEC_LANES)]

    v_rows += [pad_lanes(params["top_w"].T, VEC_LANES),        # [1, H]
               pad_lanes(params["top_b"], VEC_LANES)]           # [1, 1] in lane 0

    wslab = jnp.concatenate(w_rows, axis=0).astype(jnp.bfloat16)   # [W_ROWS, 128]
    vslab = jnp.concatenate(v_rows, axis=0).astype(jnp.float32)    # [VEC_ROWS, 96]
    assert wslab.shape == (W_ROWS, W_LANES)
    assert vslab.shape == (VEC_ROWS, VEC_LANES)
    return wslab, vslab


# ---- pure-JAX reference (exact f32 math, unfused params) --------------------
def _embed_ref(ids, emb_params):
    word_emb, pos_emb, type_emb, ln_g, ln_b = emb_params
    x = word_emb[ids] + pos_emb[None, :S, :] + type_emb[0][None, None, :]
    return _layer_norm(x, ln_g, ln_b)


def reference_forward(ids, mask, params):
    x = _embed_ref(ids, params["emb"])
    bias = (1.0 - mask.astype(jnp.float32))[:, None, :] * -1e4     # [B, 1, S]
    for lp in params["layers"]:
        (wq, bq, wk, bk, wv, bv, wo, bo, g1, bg1, w1, b1, w2, b2, g2, bg2) = lp
        outs = []
        for bi in range(B):
            xb = x[bi]
            q = xb @ wq + bq
            k = xb @ wk + bk
            v = xb @ wv + bv
            parts = []
            for h in range(NUM_HEADS):
                sl = slice(h * HEAD_DIM, (h + 1) * HEAD_DIM)
                s = (q[:, sl] @ k[:, sl].T) / math.sqrt(HEAD_DIM) + bias[bi]
                parts.append(jax.nn.softmax(s, axis=-1) @ v[:, sl])
            ctx = jnp.concatenate(parts, axis=-1)
            a = _layer_norm(xb + (ctx @ wo + bo), g1, bg1)
            f = _gelu(a @ w1 + b1) @ w2 + b2
            outs.append(_layer_norm(a + f, g2, bg2))
        x = jnp.stack(outs, axis=0)
    cls = x[:, 0, :]
    return jax.nn.sigmoid(cls @ params["top_w"] + params["top_b"])


# ---- deterministic parameter construction ----------------------------------
def make_params(key):
    keys = iter(jax.random.split(key, 128))

    def w(shape, scale=0.02):
        return jax.random.normal(next(keys), shape, jnp.float32) * scale

    emb = (w((VOCAB, H)), w((S, H)), w((2, H)),
           jnp.ones((1, H), jnp.float32), jnp.zeros((1, H), jnp.float32))

    layers = []
    for _ in range(N_LAYERS):
        layers.append((
            w((H, H)), jnp.zeros((1, H), jnp.float32),                        # Wq, bq
            w((H, H)), jnp.zeros((1, H), jnp.float32),                        # Wk, bk
            w((H, H)), jnp.zeros((1, H), jnp.float32),                        # Wv, bv
            w((H, H)), jnp.zeros((1, H), jnp.float32),                        # Wo, bo
            jnp.ones((1, H), jnp.float32), jnp.zeros((1, H), jnp.float32),    # LN1
            w((H, INTER)), jnp.zeros((1, INTER), jnp.float32),                # W1, b1
            w((INTER, H)), jnp.zeros((1, H), jnp.float32),                    # W2, b2
            jnp.ones((1, H), jnp.float32), jnp.zeros((1, H), jnp.float32),    # LN2
        ))

    return {
        "emb": emb,
        "layers": layers,
        "top_w": w((H, 1)),                       # nn.Linear(hidden, 1) weight (transposed)
        "top_b": jnp.zeros((1, 1), jnp.float32),  # nn.Linear(hidden, 1) bias
    }


if __name__ == "__main__":
    key = jax.random.PRNGKey(0)
    pkey, ikey = jax.random.split(key)
    params = make_params(pkey)
    wslab, vslab = pack_params(params)

    ids = jax.random.randint(ikey, (B, S), 0, VOCAB, dtype=jnp.int32)
    mask = jnp.array([[1] * S, [1] * (S - 2) + [0] * 2], dtype=jnp.int32)

    out = pairwise_forward(ids, mask, wslab, vslab)
    out = jax.block_until_ready(out)

    ref = reference_forward(ids, mask, params)
    assert out.shape == (B, 1)
    assert jnp.all(jnp.isfinite(out))
    # tolerance covers bf16 matmul inputs (f32 accumulation) + approx-reciprocal softmax;
    # the output sigmoid itself is exact.
    assert jnp.allclose(out, ref, rtol=1e-2, atol=1e-2), (out, ref)

    print("KERNEL_OK")
</pallas_src>

<mosaic_0001>
module attributes {stable_mosaic.version = 11 : i64} {
  func.func @fused_forward_kernel(%arg0: memref<80x64xf32, #tpu.memory_space<vmem>>, %arg1: memref<384x128xbf16, #tpu.memory_space<vmem>>, %arg2: memref<36x96xf32, #tpu.memory_space<vmem>>, %arg3: memref<16x1xf32, #tpu.memory_space<vmem>>) attributes {dimension_semantics = [], scalar_prefetch = 0 : i64, scratch_operands = 0 : i64, tpu.core_type = #tpu.core_type<tc>} {
    %c0 = arith.constant 0 : index
    %c0_0 = arith.constant 0 : index
    %0 = vector.load %arg0[%c0, %c0_0] : memref<80x64xf32, #tpu.memory_space<vmem>>, vector<16x64xf32>
    %1 = arith.truncf %0 : vector<16x64xf32> to vector<16x64xbf16>
    %c16 = arith.constant 16 : index
    %c0_1 = arith.constant 0 : index
    %2 = vector.load %arg0[%c16, %c0_1] : memref<80x64xf32, #tpu.memory_space<vmem>>, vector<64x64xf32>
    %c0_2 = arith.constant 0 : index
    %c0_3 = arith.constant 0 : index
    %3 = vector.load %arg1[%c0_2, %c0_3] : memref<384x128xbf16, #tpu.memory_space<vmem>>, vector<64x32xbf16>
    %cst = arith.constant dense<0.000000e+00> : vector<16x32xf32>
    %4 = tpu.matmul %1, %3, %cst {dimension_numbers = #tpu.dot_dimension_numbers<[1], [0], [0], [1], [0, 0, 1, 1], [], []>} : vector<16x64xbf16>, vector<64x32xbf16>, vector<16x32xf32> -> vector<16x32xf32>
    %c0_4 = arith.constant 0 : index
    %c0_5 = arith.constant 0 : index
    %5 = vector.load %arg2[%c0_4, %c0_5] : memref<36x96xf32, #tpu.memory_space<vmem>>, vector<16x32xf32>
    %6 = arith.addf %4, %5 : vector<16x32xf32>
    %c16_6 = arith.constant 16 : index
    %c0_7 = arith.constant 0 : index
    %7 = vector.load %arg2[%c16_6, %c0_7] : memref<36x96xf32, #tpu.memory_space<vmem>>, vector<1x32xf32>
    %c17 = arith.constant 17 : index
    %c0_8 = arith.constant 0 : index
    %8 = vector.load %arg2[%c17, %c0_8] : memref<36x96xf32, #tpu.memory_space<vmem>>, vector<1x32xf32>
    %cst_9 = arith.constant dense<0.000000e+00> : vector<16xf32>
    %9 = vector.multi_reduction <add>, %6, %cst_9 [1] : vector<16x32xf32> to vector<16xf32>
    %10 = vector.shape_cast %9 : vector<16xf32> to vector<16x1xf32>
    %cst_10 = arith.constant 3.200000e+01 : f32
    %11 = vector.broadcast %cst_10 : f32 to vector<16x1xf32>
    %12 = arith.divf %10, %11 : vector<16x1xf32>
    %13 = vector.broadcast %12 : vector<16x1xf32> to vector<16x32xf32>
    %14 = arith.subf %6, %13 : vector<16x32xf32>
    %15 = arith.mulf %14, %14 : vector<16x32xf32>
    %cst_11 = arith.constant dense<0.000000e+00> : vector<16xf32>
    %16 = vector.multi_reduction <add>, %15, %cst_11 [1] : vector<16x32xf32> to vector<16xf32>
    %17 = vector.shape_cast %16 : vector<16xf32> to vector<16x1xf32>
    %cst_12 = arith.constant 3.200000e+01 : f32
    %18 = vector.broadcast %cst_12 : f32 to vector<16x1xf32>
    %19 = arith.divf %17, %18 : vector<16x1xf32>
    %20 = vector.broadcast %12 : vector<16x1xf32> to vector<16x32xf32>
    %21 = arith.subf %6, %20 : vector<16x32xf32>
    %cst_13 = arith.constant 9.99999996E-13 : f32
    %22 = vector.broadcast %cst_13 : f32 to vector<16x1xf32>
    %23 = arith.addf %19, %22 : vector<16x1xf32>
    %24 = math.rsqrt %23 : vector<16x1xf32>
    %25 = vector.broadcast %24 : vector<16x1xf32> to vector<16x32xf32>
    %26 = arith.mulf %21, %25 : vector<16x32xf32>
    %27 = vector.broadcast %7 : vector<1x32xf32> to vector<16x32xf32>
    %28 = arith.mulf %26, %27 : vector<16x32xf32>
    %29 = vector.broadcast %8 : vector<1x32xf32> to vector<16x32xf32>
    %30 = arith.addf %28, %29 : vector<16x32xf32>
    %31 = arith.truncf %30 : vector<16x32xf32> to vector<16x32xbf16>
    %c64 = arith.constant 64 : index
    %c0_14 = arith.constant 0 : index
    %32 = vector.load %arg1[%c64, %c0_14] : memref<384x128xbf16, #tpu.memory_space<vmem>>, vector<32x96xbf16>
    %cst_15 = arith.constant dense<0.000000e+00> : vector<16x96xf32>
    %33 = tpu.matmul %31, %32, %cst_15 {dimension_numbers = #tpu.dot_dimension_numbers<[1], [0], [0], [1], [0, 0, 1, 1], [], []>} : vector<16x32xbf16>, vector<32x96xbf16>, vector<16x96xf32> -> vector<16x96xf32>
    %c18 = arith.constant 18 : index
    %c0_16 = arith.constant 0 : index
    %34 = vector.load %arg2[%c18, %c0_16] : memref<36x96xf32, #tpu.memory_space<vmem>>, vector<1x96xf32>
    %35 = vector.broadcast %34 : vector<1x96xf32> to vector<16x96xf32>
    %36 = arith.addf %33, %35 : vector<16x96xf32>
    %37 = vector.extract_strided_slice %36 {offsets = [0, 0], sizes = [16, 8], strides = [1, 1]} : vector<16x96xf32> to vector<16x8xf32>
    %38 = vector.extract_strided_slice %36 {offsets = [0, 8], sizes = [16, 8], strides = [1, 1]} : vector<16x96xf32> to vector<16x8xf32>
    %39 = vector.extract_strided_slice %36 {offsets = [0, 16], sizes = [16, 8], strides = [1, 1]} : vector<16x96xf32> to vector<16x8xf32>
    %40 = vector.extract_strided_slice %36 {offsets = [0, 24], sizes = [16, 8], strides = [1, 1]} : vector<16x96xf32> to vector<16x8xf32>
    %41 = tpu.concatenate %37, %38, %39, %40 in 0 : vector<16x8xf32>, vector<16x8xf32>, vector<16x8xf32>, vector<16x8xf32> -> vector<64x8xf32>
    %42 = vector.extract_strided_slice %36 {offsets = [0, 32], sizes = [16, 8], strides = [1, 1]} : vector<16x96xf32> to vector<16x8xf32>
    %43 = vector.extract_strided_slice %36 {offsets = [0, 40], sizes = [16, 8], strides = [1, 1]} : vector<16x96xf32> to vector<16x8xf32>
    %44 = vector.extract_strided_slice %36 {offsets = [0, 48], sizes = [16, 8], strides = [1, 1]} : vector<16x96xf32> to vector<16x8xf32>
    %45 = vector.extract_strided_slice %36 {offsets = [0, 56], sizes = [16, 8], strides = [1, 1]} : vector<16x96xf32> to vector<16x8xf32>
    %46 = tpu.concatenate %42, %43, %44, %45 in 0 : vector<16x8xf32>, vector<16x8xf32>, vector<16x8xf32>, vector<16x8xf32> -> vector<64x8xf32>
    %47 = vector.extract_strided_slice %36 {offsets = [0, 64], sizes = [16, 8], strides = [1, 1]} : vector<16x96xf32> to vector<16x8xf32>
    %48 = vector.extract_strided_slice %36 {offsets = [0, 72], sizes = [16, 8], strides = [1, 1]} : vector<16x96xf32> to vector<16x8xf32>
    %49 = vector.extract_strided_slice %36 {offsets = [0, 80], sizes = [16, 8], strides = [1, 1]} : vector<16x96xf32> to vector<16x8xf32>
    %50 = vector.extract_strided_slice %36 {offsets = [0, 88], sizes = [16, 8], strides = [1, 1]} : vector<16x96xf32> to vector<16x8xf32>
    %51 = tpu.concatenate %47, %48, %49, %50 in 0 : vector<16x8xf32>, vector<16x8xf32>, vector<16x8xf32>, vector<16x8xf32> -> vector<64x8xf32>
    %52 = arith.truncf %41 : vector<64x8xf32> to vector<64x8xbf16>
    %53 = tpu.transpose %46, [1, 0] : vector<64x8xf32> -> vector<8x64xf32>
    %54 = arith.truncf %53 : vector<8x64xf32> to vector<8x64xbf16>
    %cst_17 = arith.constant dense<0.000000e+00> : vector<64x64xf32>
    %55 = tpu.matmul %52, %54, %cst_17 {dimension_numbers = #tpu.dot_dimension_numbers<[1], [0], [0], [1], [0, 0, 1, 1], [], []>} : vector<64x8xbf16>, vector<8x64xbf16>, vector<64x64xf32> -> vector<64x64xf32>
    %56 = arith.addf %55, %2 : vector<64x64xf32>
    %cst_18 = arith.constant dense<0xFF800000> : vector<64xf32>
    %57 = vector.multi_reduction <maximumf>, %56, %cst_18 [1] : vector<64x64xf32> to vector<64xf32>
    %58 = vector.shape_cast %57 : vector<64xf32> to vector<64x1xf32>
    %59 = vector.broadcast %58 : vector<64x1xf32> to vector<64x64xf32>
    %60 = arith.subf %56, %59 : vector<64x64xf32>
    %61 = math.exp %60 : vector<64x64xf32>
    %cst_19 = arith.constant dense<0.000000e+00> : vector<64xf32>
    %62 = vector.multi_reduction <add>, %61, %cst_19 [1] : vector<64x64xf32> to vector<64xf32>
    %63 = vector.shape_cast %62 : vector<64xf32> to vector<64x1xf32>
    %64 = tpu.reciprocal %63 {approx = true} : vector<64x1xf32> -> vector<64x1xf32>
    %65 = vector.broadcast %64 : vector<64x1xf32> to vector<64x64xf32>
    %66 = arith.mulf %61, %65 : vector<64x64xf32>
    %67 = arith.truncf %66 : vector<64x64xf32> to vector<64x64xbf16>
    %68 = arith.truncf %51 : vector<64x8xf32> to vector<64x8xbf16>
    %cst_20 = arith.constant dense<0.000000e+00> : vector<64x8xf32>
    %69 = tpu.matmul %67, %68, %cst_20 {dimension_numbers = #tpu.dot_dimension_numbers<[1], [0], [0], [1], [0, 0, 1, 1], [], []>} : vector<64x64xbf16>, vector<64x8xbf16>, vector<64x8xf32> -> vector<64x8xf32>
    %70 = vector.extract_strided_slice %69 {offsets = [0, 0], sizes = [16, 8], strides = [1, 1]} : vector<64x8xf32> to vector<16x8xf32>
    %71 = vector.extract_strided_slice %69 {offsets = [16, 0], sizes = [16, 8], strides = [1, 1]} : vector<64x8xf32> to vector<16x8xf32>
    %72 = vector.extract_strided_slice %69 {offsets = [32, 0], sizes = [16, 8], strides = [1, 1]} : vector<64x8xf32> to vector<16x8xf32>
    %73 = vector.extract_strided_slice %69 {offsets = [48, 0], sizes = [16, 8], strides = [1, 1]} : vector<64x8xf32> to vector<16x8xf32>
    %74 = tpu.concatenate %70, %71, %72, %73 in 1 : vector<16x8xf32>, vector<16x8xf32>, vector<16x8xf32>, vector<16x8xf32> -> vector<16x32xf32>
    %75 = arith.truncf %74 : vector<16x32xf32> to vector<16x32xbf16>
    %c96 = arith.constant 96 : index
    %c0_21 = arith.constant 0 : index
    %76 = vector.load %arg1[%c96, %c0_21] : memref<384x128xbf16, #tpu.memory_space<vmem>>, vector<32x32xbf16>
    %cst_22 = arith.constant dense<0.000000e+00> : vector<16x32xf32>
    %77 = tpu.matmul %75, %76, %cst_22 {dimension_numbers = #tpu.dot_dimension_numbers<[1], [0], [0], [1], [0, 0, 1, 1], [], []>} : vector<16x32xbf16>, vector<32x32xbf16>, vector<16x32xf32> -> vector<16x32xf32>
    %c19 = arith.constant 19 : index
    %c0_23 = arith.constant 0 : index
    %78 = vector.load %arg2[%c19, %c0_23] : memref<36x96xf32, #tpu.memory_space<vmem>>, vector<1x32xf32>
    %79 = vector.broadcast %78 : vector<1x32xf32> to vector<16x32xf32>
    %80 = arith.addf %77, %79 : vector<16x32xf32>
    %81 = arith.addf %30, %80 : vector<16x32xf32>
    %c20 = arith.constant 20 : index
    %c0_24 = arith.constant 0 : index
    %82 = vector.load %arg2[%c20, %c0_24] : memref<36x96xf32, #tpu.memory_space<vmem>>, vector<1x32xf32>
    %c21 = arith.constant 21 : index
    %c0_25 = arith.constant 0 : index
    %83 = vector.load %arg2[%c21, %c0_25] : memref<36x96xf32, #tpu.memory_space<vmem>>, vector<1x32xf32>
    %cst_26 = arith.constant dense<0.000000e+00> : vector<16xf32>
    %84 = vector.multi_reduction <add>, %81, %cst_26 [1] : vector<16x32xf32> to vector<16xf32>
    %85 = vector.shape_cast %84 : vector<16xf32> to vector<16x1xf32>
    %cst_27 = arith.constant 3.200000e+01 : f32
    %86 = vector.broadcast %cst_27 : f32 to vector<16x1xf32>
    %87 = arith.divf %85, %86 : vector<16x1xf32>
    %88 = vector.broadcast %87 : vector<16x1xf32> to vector<16x32xf32>
    %89 = arith.subf %81, %88 : vector<16x32xf32>
    %90 = arith.mulf %89, %89 : vector<16x32xf32>
    %cst_28 = arith.constant dense<0.000000e+00> : vector<16xf32>
    %91 = vector.multi_reduction <add>, %90, %cst_28 [1] : vector<16x32xf32> to vector<16xf32>
    %92 = vector.shape_cast %91 : vector<16xf32> to vector<16x1xf32>
    %cst_29 = arith.constant 3.200000e+01 : f32
    %93 = vector.broadcast %cst_29 : f32 to vector<16x1xf32>
    %94 = arith.divf %92, %93 : vector<16x1xf32>
    %95 = vector.broadcast %87 : vector<16x1xf32> to vector<16x32xf32>
    %96 = arith.subf %81, %95 : vector<16x32xf32>
    %cst_30 = arith.constant 9.99999996E-13 : f32
    %97 = vector.broadcast %cst_30 : f32 to vector<16x1xf32>
    %98 = arith.addf %94, %97 : vector<16x1xf32>
    %99 = math.rsqrt %98 : vector<16x1xf32>
    %100 = vector.broadcast %99 : vector<16x1xf32> to vector<16x32xf32>
    %101 = arith.mulf %96, %100 : vector<16x32xf32>
    %102 = vector.broadcast %82 : vector<1x32xf32> to vector<16x32xf32>
    %103 = arith.mulf %101, %102 : vector<16x32xf32>
    %104 = vector.broadcast %83 : vector<1x32xf32> to vector<16x32xf32>
    %105 = arith.addf %103, %104 : vector<16x32xf32>
    %106 = arith.truncf %105 : vector<16x32xf32> to vector<16x32xbf16>
    %c128 = arith.constant 128 : index
    %c0_31 = arith.constant 0 : index
    %107 = vector.load %arg1[%c128, %c0_31] : memref<384x128xbf16, #tpu.memory_space<vmem>>, vector<32x64xbf16>
    %cst_32 = arith.constant dense<0.000000e+00> : vector<16x64xf32>
    %108 = tpu.matmul %106, %107, %cst_32 {dimension_numbers = #tpu.dot_dimension_numbers<[1], [0], [0], [1], [0, 0, 1, 1], [], []>} : vector<16x32xbf16>, vector<32x64xbf16>, vector<16x64xf32> -> vector<16x64xf32>
    %c22 = arith.constant 22 : index
    %c0_33 = arith.constant 0 : index
    %109 = vector.load %arg2[%c22, %c0_33] : memref<36x96xf32, #tpu.memory_space<vmem>>, vector<1x64xf32>
    %110 = vector.broadcast %109 : vector<1x64xf32> to vector<16x64xf32>
    %111 = arith.addf %108, %110 : vector<16x64xf32>
    %cst_34 = arith.constant 5.000000e-01 : f32
    %112 = vector.broadcast %cst_34 : f32 to vector<16x64xf32>
    %113 = arith.mulf %112, %111 : vector<16x64xf32>
    %114 = arith.mulf %111, %111 : vector<16x64xf32>
    %115 = arith.mulf %111, %114 : vector<16x64xf32>
    %cst_35 = arith.constant 4.471500e-02 : f32
    %116 = vector.broadcast %cst_35 : f32 to vector<16x64xf32>
    %117 = arith.mulf %116, %115 : vector<16x64xf32>
    %118 = arith.addf %111, %117 : vector<16x64xf32>
    %cst_36 = arith.constant 0.797884583 : f32
    %119 = vector.broadcast %cst_36 : f32 to vector<16x64xf32>
    %120 = arith.mulf %119, %118 : vector<16x64xf32>
    %121 = math.tanh %120 : vector<16x64xf32>
    %cst_37 = arith.constant 1.000000e+00 : f32
    %122 = vector.broadcast %cst_37 : f32 to vector<16x64xf32>
    %123 = arith.addf %122, %121 : vector<16x64xf32>
    %124 = arith.mulf %113, %123 : vector<16x64xf32>
    %125 = arith.truncf %124 : vector<16x64xf32> to vector<16x64xbf16>
    %c160 = arith.constant 160 : index
    %c0_38 = arith.constant 0 : index
    %126 = vector.load %arg1[%c160, %c0_38] : memref<384x128xbf16, #tpu.memory_space<vmem>>, vector<64x32xbf16>
    %cst_39 = arith.constant dense<0.000000e+00> : vector<16x32xf32>
    %127 = tpu.matmul %125, %126, %cst_39 {dimension_numbers = #tpu.dot_dimension_numbers<[1], [0], [0], [1], [0, 0, 1, 1], [], []>} : vector<16x64xbf16>, vector<64x32xbf16>, vector<16x32xf32> -> vector<16x32xf32>
    %c23 = arith.constant 23 : index
    %c0_40 = arith.constant 0 : index
    %128 = vector.load %arg2[%c23, %c0_40] : memref<36x96xf32, #tpu.memory_space<vmem>>, vector<1x32xf32>
    %129 = vector.broadcast %128 : vector<1x32xf32> to vector<16x32xf32>
    %130 = arith.addf %127, %129 : vector<16x32xf32>
    %131 = arith.addf %105, %130 : vector<16x32xf32>
    %c24 = arith.constant 24 : index
    %c0_41 = arith.constant 0 : index
    %132 = vector.load %arg2[%c24, %c0_41] : memref<36x96xf32, #tpu.memory_space<vmem>>, vector<1x32xf32>
    %c25 = arith.constant 25 : index
    %c0_42 = arith.constant 0 : index
    %133 = vector.load %arg2[%c25, %c0_42] : memref<36x96xf32, #tpu.memory_space<vmem>>, vector<1x32xf32>
    %cst_43 = arith.constant dense<0.000000e+00> : vector<16xf32>
    %134 = vector.multi_reduction <add>, %131, %cst_43 [1] : vector<16x32xf32> to vector<16xf32>
    %135 = vector.shape_cast %134 : vector<16xf32> to vector<16x1xf32>
    %cst_44 = arith.constant 3.200000e+01 : f32
    %136 = vector.broadcast %cst_44 : f32 to vector<16x1xf32>
    %137 = arith.divf %135, %136 : vector<16x1xf32>
    %138 = vector.broadcast %137 : vector<16x1xf32> to vector<16x32xf32>
    %139 = arith.subf %131, %138 : vector<16x32xf32>
    %140 = arith.mulf %139, %139 : vector<16x32xf32>
    %cst_45 = arith.constant dense<0.000000e+00> : vector<16xf32>
    %141 = vector.multi_reduction <add>, %140, %cst_45 [1] : vector<16x32xf32> to vector<16xf32>
    %142 = vector.shape_cast %141 : vector<16xf32> to vector<16x1xf32>
    %cst_46 = arith.constant 3.200000e+01 : f32
    %143 = vector.broadcast %cst_46 : f32 to vector<16x1xf32>
    %144 = arith.divf %142, %143 : vector<16x1xf32>
    %145 = vector.broadcast %137 : vector<16x1xf32> to vector<16x32xf32>
    %146 = arith.subf %131, %145 : vector<16x32xf32>
    %cst_47 = arith.constant 9.99999996E-13 : f32
    %147 = vector.broadcast %cst_47 : f32 to vector<16x1xf32>
    %148 = arith.addf %144, %147 : vector<16x1xf32>
    %149 = math.rsqrt %148 : vector<16x1xf32>
    %150 = vector.broadcast %149 : vector<16x1xf32> to vector<16x32xf32>
    %151 = arith.mulf %146, %150 : vector<16x32xf32>
    %152 = vector.broadcast %132 : vector<1x32xf32> to vector<16x32xf32>
    %153 = arith.mulf %151, %152 : vector<16x32xf32>
    %154 = vector.broadcast %133 : vector<1x32xf32> to vector<16x32xf32>
    %155 = arith.addf %153, %154 : vector<16x32xf32>
    %156 = arith.truncf %155 : vector<16x32xf32> to vector<16x32xbf16>
    %c224 = arith.constant 224 : index
    %c0_48 = arith.constant 0 : index
    %157 = vector.load %arg1[%c224, %c0_48] : memref<384x128xbf16, #tpu.memory_space<vmem>>, vector<32x96xbf16>
    %cst_49 = arith.constant dense<0.000000e+00> : vector<16x96xf32>
    %158 = tpu.matmul %156, %157, %cst_49 {dimension_numbers = #tpu.dot_dimension_numbers<[1], [0], [0], [1], [0, 0, 1, 1], [], []>} : vector<16x32xbf16>, vector<32x96xbf16>, vector<16x96xf32> -> vector<16x96xf32>
    %c26 = arith.constant 26 : index
    %c0_50 = arith.constant 0 : index
    %159 = vector.load %arg2[%c26, %c0_50] : memref<36x96xf32, #tpu.memory_space<vmem>>, vector<1x96xf32>
    %160 = vector.broadcast %159 : vector<1x96xf32> to vector<16x96xf32>
    %161 = arith.addf %158, %160 : vector<16x96xf32>
    %162 = vector.extract_strided_slice %161 {offsets = [0, 0], sizes = [16, 8], strides = [1, 1]} : vector<16x96xf32> to vector<16x8xf32>
    %163 = vector.extract_strided_slice %161 {offsets = [0, 8], sizes = [16, 8], strides = [1, 1]} : vector<16x96xf32> to vector<16x8xf32>
    %164 = vector.extract_strided_slice %161 {offsets = [0, 16], sizes = [16, 8], strides = [1, 1]} : vector<16x96xf32> to vector<16x8xf32>
    %165 = vector.extract_strided_slice %161 {offsets = [0, 24], sizes = [16, 8], strides = [1, 1]} : vector<16x96xf32> to vector<16x8xf32>
    %166 = tpu.concatenate %162, %163, %164, %165 in 0 : vector<16x8xf32>, vector<16x8xf32>, vector<16x8xf32>, vector<16x8xf32> -> vector<64x8xf32>
    %167 = vector.extract_strided_slice %161 {offsets = [0, 32], sizes = [16, 8], strides = [1, 1]} : vector<16x96xf32> to vector<16x8xf32>
    %168 = vector.extract_strided_slice %161 {offsets = [0, 40], sizes = [16, 8], strides = [1, 1]} : vector<16x96xf32> to vector<16x8xf32>
    %169 = vector.extract_strided_slice %161 {offsets = [0, 48], sizes = [16, 8], strides = [1, 1]} : vector<16x96xf32> to vector<16x8xf32>
    %170 = vector.extract_strided_slice %161 {offsets = [0, 56], sizes = [16, 8], strides = [1, 1]} : vector<16x96xf32> to vector<16x8xf32>
    %171 = tpu.concatenate %167, %168, %169, %170 in 0 : vector<16x8xf32>, vector<16x8xf32>, vector<16x8xf32>, vector<16x8xf32> -> vector<64x8xf32>
    %172 = vector.extract_strided_slice %161 {offsets = [0, 64], sizes = [16, 8], strides = [1, 1]} : vector<16x96xf32> to vector<16x8xf32>
    %173 = vector.extract_strided_slice %161 {offsets = [0, 72], sizes = [16, 8], strides = [1, 1]} : vector<16x96xf32> to vector<16x8xf32>
    %174 = vector.extract_strided_slice %161 {offsets = [0, 80], sizes = [16, 8], strides = [1, 1]} : vector<16x96xf32> to vector<16x8xf32>
    %175 = vector.extract_strided_slice %161 {offsets = [0, 88], sizes = [16, 8], strides = [1, 1]} : vector<16x96xf32> to vector<16x8xf32>
    %176 = tpu.concatenate %172, %173, %174, %175 in 0 : vector<16x8xf32>, vector<16x8xf32>, vector<16x8xf32>, vector<16x8xf32> -> vector<64x8xf32>
    %177 = arith.truncf %166 : vector<64x8xf32> to vector<64x8xbf16>
    %178 = tpu.transpose %171, [1, 0] : vector<64x8xf32> -> vector<8x64xf32>
    %179 = arith.truncf %178 : vector<8x64xf32> to vector<8x64xbf16>
    %cst_51 = arith.constant dense<0.000000e+00> : vector<64x64xf32>
    %180 = tpu.matmul %177, %179, %cst_51 {dimension_numbers = #tpu.dot_dimension_numbers<[1], [0], [0], [1], [0, 0, 1, 1], [], []>} : vector<64x8xbf16>, vector<8x64xbf16>, vector<64x64xf32> -> vector<64x64xf32>
    %181 = arith.addf %180, %2 : vector<64x64xf32>
    %cst_52 = arith.constant dense<0xFF800000> : vector<64xf32>
    %182 = vector.multi_reduction <maximumf>, %181, %cst_52 [1] : vector<64x64xf32> to vector<64xf32>
    %183 = vector.shape_cast %182 : vector<64xf32> to vector<64x1xf32>
    %184 = vector.broadcast %183 : vector<64x1xf32> to vector<64x64xf32>
    %185 = arith.subf %181, %184 : vector<64x64xf32>
    %186 = math.exp %185 : vector<64x64xf32>
    %cst_53 = arith.constant dense<0.000000e+00> : vector<64xf32>
    %187 = vector.multi_reduction <add>, %186, %cst_53 [1] : vector<64x64xf32> to vector<64xf32>
    %188 = vector.shape_cast %187 : vector<64xf32> to vector<64x1xf32>
    %189 = tpu.reciprocal %188 {approx = true} : vector<64x1xf32> -> vector<64x1xf32>
    %190 = vector.broadcast %189 : vector<64x1xf32> to vector<64x64xf32>
    %191 = arith.mulf %186, %190 : vector<64x64xf32>
    %192 = arith.truncf %191 : vector<64x64xf32> to vector<64x64xbf16>
    %193 = arith.truncf %176 : vector<64x8xf32> to vector<64x8xbf16>
    %cst_54 = arith.constant dense<0.000000e+00> : vector<64x8xf32>
    %194 = tpu.matmul %192, %193, %cst_54 {dimension_numbers = #tpu.dot_dimension_numbers<[1], [0], [0], [1], [0, 0, 1, 1], [], []>} : vector<64x64xbf16>, vector<64x8xbf16>, vector<64x8xf32> -> vector<64x8xf32>
    %195 = vector.extract_strided_slice %194 {offsets = [0, 0], sizes = [16, 8], strides = [1, 1]} : vector<64x8xf32> to vector<16x8xf32>
    %196 = vector.extract_strided_slice %194 {offsets = [16, 0], sizes = [16, 8], strides = [1, 1]} : vector<64x8xf32> to vector<16x8xf32>
    %197 = vector.extract_strided_slice %194 {offsets = [32, 0], sizes = [16, 8], strides = [1, 1]} : vector<64x8xf32> to vector<16x8xf32>
    %198 = vector.extract_strided_slice %194 {offsets = [48, 0], sizes = [16, 8], strides = [1, 1]} : vector<64x8xf32> to vector<16x8xf32>
    %199 = tpu.concatenate %195, %196, %197, %198 in 1 : vector<16x8xf32>, vector<16x8xf32>, vector<16x8xf32>, vector<16x8xf32> -> vector<16x32xf32>
    %200 = arith.truncf %199 : vector<16x32xf32> to vector<16x32xbf16>
    %c256 = arith.constant 256 : index
    %c0_55 = arith.constant 0 : index
    %201 = vector.load %arg1[%c256, %c0_55] : memref<384x128xbf16, #tpu.memory_space<vmem>>, vector<32x32xbf16>
    %cst_56 = arith.constant dense<0.000000e+00> : vector<16x32xf32>
    %202 = tpu.matmul %200, %201, %cst_56 {dimension_numbers = #tpu.dot_dimension_numbers<[1], [0], [0], [1], [0, 0, 1, 1], [], []>} : vector<16x32xbf16>, vector<32x32xbf16>, vector<16x32xf32> -> vector<16x32xf32>
    %c27 = arith.constant 27 : index
    %c0_57 = arith.constant 0 : index
    %203 = vector.load %arg2[%c27, %c0_57] : memref<36x96xf32, #tpu.memory_space<vmem>>, vector<1x32xf32>
    %204 = vector.broadcast %203 : vector<1x32xf32> to vector<16x32xf32>
    %205 = arith.addf %202, %204 : vector<16x32xf32>
    %206 = arith.addf %155, %205 : vector<16x32xf32>
    %c28 = arith.constant 28 : index
    %c0_58 = arith.constant 0 : index
    %207 = vector.load %arg2[%c28, %c0_58] : memref<36x96xf32, #tpu.memory_space<vmem>>, vector<1x32xf32>
    %c29 = arith.constant 29 : index
    %c0_59 = arith.constant 0 : index
    %208 = vector.load %arg2[%c29, %c0_59] : memref<36x96xf32, #tpu.memory_space<vmem>>, vector<1x32xf32>
    %cst_60 = arith.constant dense<0.000000e+00> : vector<16xf32>
    %209 = vector.multi_reduction <add>, %206, %cst_60 [1] : vector<16x32xf32> to vector<16xf32>
    %210 = vector.shape_cast %209 : vector<16xf32> to vector<16x1xf32>
    %cst_61 = arith.constant 3.200000e+01 : f32
    %211 = vector.broadcast %cst_61 : f32 to vector<16x1xf32>
    %212 = arith.divf %210, %211 : vector<16x1xf32>
    %213 = vector.broadcast %212 : vector<16x1xf32> to vector<16x32xf32>
    %214 = arith.subf %206, %213 : vector<16x32xf32>
    %215 = arith.mulf %214, %214 : vector<16x32xf32>
    %cst_62 = arith.constant dense<0.000000e+00> : vector<16xf32>
    %216 = vector.multi_reduction <add>, %215, %cst_62 [1] : vector<16x32xf32> to vector<16xf32>
    %217 = vector.shape_cast %216 : vector<16xf32> to vector<16x1xf32>
    %cst_63 = arith.constant 3.200000e+01 : f32
    %218 = vector.broadcast %cst_63 : f32 to vector<16x1xf32>
    %219 = arith.divf %217, %218 : vector<16x1xf32>
    %220 = vector.broadcast %212 : vector<16x1xf32> to vector<16x32xf32>
    %221 = arith.subf %206, %220 : vector<16x32xf32>
    %cst_64 = arith.constant 9.99999996E-13 : f32
    %222 = vector.broadcast %cst_64 : f32 to vector<16x1xf32>
    %223 = arith.addf %219, %222 : vector<16x1xf32>
    %224 = math.rsqrt %223 : vector<16x1xf32>
    %225 = vector.broadcast %224 : vector<16x1xf32> to vector<16x32xf32>
    %226 = arith.mulf %221, %225 : vector<16x32xf32>
    %227 = vector.broadcast %207 : vector<1x32xf32> to vector<16x32xf32>
    %228 = arith.mulf %226, %227 : vector<16x32xf32>
    %229 = vector.broadcast %208 : vector<1x32xf32> to vector<16x32xf32>
    %230 = arith.addf %228, %229 : vector<16x32xf32>
    %231 = arith.truncf %230 : vector<16x32xf32> to vector<16x32xbf16>
    %c288 = arith.constant 288 : index
    %c0_65 = arith.constant 0 : index
    %232 = vector.load %arg1[%c288, %c0_65] : memref<384x128xbf16, #tpu.memory_space<vmem>>, vector<32x64xbf16>
    %cst_66 = arith.constant dense<0.000000e+00> : vector<16x64xf32>
    %233 = tpu.matmul %231, %232, %cst_66 {dimension_numbers = #tpu.dot_dimension_numbers<[1], [0], [0], [1], [0, 0, 1, 1], [], []>} : vector<16x32xbf16>, vector<32x64xbf16>, vector<16x64xf32> -> vector<16x64xf32>
    %c30 = arith.constant 30 : index
    %c0_67 = arith.constant 0 : index
    %234 = vector.load %arg2[%c30, %c0_67] : memref<36x96xf32, #tpu.memory_space<vmem>>, vector<1x64xf32>
    %235 = vector.broadcast %234 : vector<1x64xf32> to vector<16x64xf32>
    %236 = arith.addf %233, %235 : vector<16x64xf32>
    %cst_68 = arith.constant 5.000000e-01 : f32
    %237 = vector.broadcast %cst_68 : f32 to vector<16x64xf32>
    %238 = arith.mulf %237, %236 : vector<16x64xf32>
    %239 = arith.mulf %236, %236 : vector<16x64xf32>
    %240 = arith.mulf %236, %239 : vector<16x64xf32>
    %cst_69 = arith.constant 4.471500e-02 : f32
    %241 = vector.broadcast %cst_69 : f32 to vector<16x64xf32>
    %242 = arith.mulf %241, %240 : vector<16x64xf32>
    %243 = arith.addf %236, %242 : vector<16x64xf32>
    %cst_70 = arith.constant 0.797884583 : f32
    %244 = vector.broadcast %cst_70 : f32 to vector<16x64xf32>
    %245 = arith.mulf %244, %243 : vector<16x64xf32>
    %246 = math.tanh %245 : vector<16x64xf32>
    %cst_71 = arith.constant 1.000000e+00 : f32
    %247 = vector.broadcast %cst_71 : f32 to vector<16x64xf32>
    %248 = arith.addf %247, %246 : vector<16x64xf32>
    %249 = arith.mulf %238, %248 : vector<16x64xf32>
    %250 = arith.truncf %249 : vector<16x64xf32> to vector<16x64xbf16>
    %c320 = arith.constant 320 : index
    %c0_72 = arith.constant 0 : index
    %251 = vector.load %arg1[%c320, %c0_72] : memref<384x128xbf16, #tpu.memory_space<vmem>>, vector<64x32xbf16>
    %cst_73 = arith.constant dense<0.000000e+00> : vector<16x32xf32>
    %252 = tpu.matmul %250, %251, %cst_73 {dimension_numbers = #tpu.dot_dimension_numbers<[1], [0], [0], [1], [0, 0, 1, 1], [], []>} : vector<16x64xbf16>, vector<64x32xbf16>, vector<16x32xf32> -> vector<16x32xf32>
    %c31 = arith.constant 31 : index
    %c0_74 = arith.constant 0 : index
    %253 = vector.load %arg2[%c31, %c0_74] : memref<36x96xf32, #tpu.memory_space<vmem>>, vector<1x32xf32>
    %254 = vector.broadcast %253 : vector<1x32xf32> to vector<16x32xf32>
    %255 = arith.addf %252, %254 : vector<16x32xf32>
    %256 = arith.addf %230, %255 : vector<16x32xf32>
    %c32 = arith.constant 32 : index
    %c0_75 = arith.constant 0 : index
    %257 = vector.load %arg2[%c32, %c0_75] : memref<36x96xf32, #tpu.memory_space<vmem>>, vector<1x32xf32>
    %c33 = arith.constant 33 : index
    %c0_76 = arith.constant 0 : index
    %258 = vector.load %arg2[%c33, %c0_76] : memref<36x96xf32, #tpu.memory_space<vmem>>, vector<1x32xf32>
    %cst_77 = arith.constant dense<0.000000e+00> : vector<16xf32>
    %259 = vector.multi_reduction <add>, %256, %cst_77 [1] : vector<16x32xf32> to vector<16xf32>
    %260 = vector.shape_cast %259 : vector<16xf32> to vector<16x1xf32>
    %cst_78 = arith.constant 3.200000e+01 : f32
    %261 = vector.broadcast %cst_78 : f32 to vector<16x1xf32>
    %262 = arith.divf %260, %261 : vector<16x1xf32>
    %263 = vector.broadcast %262 : vector<16x1xf32> to vector<16x32xf32>
    %264 = arith.subf %256, %263 : vector<16x32xf32>
    %265 = arith.mulf %264, %264 : vector<16x32xf32>
    %cst_79 = arith.constant dense<0.000000e+00> : vector<16xf32>
    %266 = vector.multi_reduction <add>, %265, %cst_79 [1] : vector<16x32xf32> to vector<16xf32>
    %267 = vector.shape_cast %266 : vector<16xf32> to vector<16x1xf32>
    %cst_80 = arith.constant 3.200000e+01 : f32
    %268 = vector.broadcast %cst_80 : f32 to vector<16x1xf32>
    %269 = arith.divf %267, %268 : vector<16x1xf32>
    %270 = vector.broadcast %262 : vector<16x1xf32> to vector<16x32xf32>
    %271 = arith.subf %256, %270 : vector<16x32xf32>
    %cst_81 = arith.constant 9.99999996E-13 : f32
    %272 = vector.broadcast %cst_81 : f32 to vector<16x1xf32>
    %273 = arith.addf %269, %272 : vector<16x1xf32>
    %274 = math.rsqrt %273 : vector<16x1xf32>
    %275 = vector.broadcast %274 : vector<16x1xf32> to vector<16x32xf32>
    %276 = arith.mulf %271, %275 : vector<16x32xf32>
    %277 = vector.broadcast %257 : vector<1x32xf32> to vector<16x32xf32>
    %278 = arith.mulf %276, %277 : vector<16x32xf32>
    %279 = vector.broadcast %258 : vector<1x32xf32> to vector<16x32xf32>
    %280 = arith.addf %278, %279 : vector<16x32xf32>
    %c34 = arith.constant 34 : index
    %c0_82 = arith.constant 0 : index
    %281 = vector.load %arg2[%c34, %c0_82] : memref<36x96xf32, #tpu.memory_space<vmem>>, vector<1x32xf32>
    %c35 = arith.constant 35 : index
    %c0_83 = arith.constant 0 : index
    %282 = vector.load %arg2[%c35, %c0_83] : memref<36x96xf32, #tpu.memory_space<vmem>>, vector<1x1xf32>
    %283 = vector.broadcast %281 : vector<1x32xf32> to vector<16x32xf32>
    %284 = arith.mulf %280, %283 : vector<16x32xf32>
    %cst_84 = arith.constant dense<0.000000e+00> : vector<16xf32>
    %285 = vector.multi_reduction <add>, %284, %cst_84 [1] : vector<16x32xf32> to vector<16xf32>
    %286 = vector.shape_cast %285 : vector<16xf32> to vector<16x1xf32>
    %287 = vector.broadcast %282 : vector<1x1xf32> to vector<16x1xf32>
    %288 = arith.addf %286, %287 : vector<16x1xf32>
    %cst_85 = arith.constant 0.000000e+00 : f32
    %289 = vector.broadcast %cst_85 : f32 to vector<16x1xf32>
    %290 = arith.subf %289, %288 : vector<16x1xf32>
    %291 = math.exp %290 : vector<16x1xf32>
    %cst_86 = arith.constant 1.000000e+00 : f32
    %292 = vector.broadcast %cst_86 : f32 to vector<16x1xf32>
    %293 = arith.addf %292, %291 : vector<16x1xf32>
    %cst_87 = arith.constant 1.000000e+00 : f32
    %294 = vector.broadcast %cst_87 : f32 to vector<16x1xf32>
    %295 = arith.divf %294, %293 : vector<16x1xf32>
    %c0_88 = arith.constant 0 : index
    %c0_89 = arith.constant 0 : index
    %296 = vector.load %arg3[%c0_88, %c0_89] : memref<16x1xf32, #tpu.memory_space<vmem>>, vector<16x1xf32>
    tpu.vector_store %arg3[%c0_88, %c0_89], %295 {strides = array<i32>} : memref<16x1xf32, #tpu.memory_space<vmem>>, vector<16x1xf32>,
    return
  }
}

</mosaic_0001>

<llo_original>
// kernel: tile.8
$region0: #{tile.8}
  #allocation0 [shape = 's32[1]{0}', space=sflag, size = 0x4, scoped, tag = 'scoped memory for tile.8']
  %s0 = inlined_call_operand.vmem [shape: pred[16], index: 0, kind: input, shape index: {}]
  %s1 = inlined_call_operand.vmem [shape: pred[4,16], index: 1, kind: output, shape index: {}]
  // Predicated region
  $region2: #{tile.8} parent=0 // pred_check
    _
  $region3: #{tile.8} parent=0 // pred_check_branch
    %3 = sbr.rel (0) target = $region5
  $region4: #{tile.8} parent=0 // pred_region
    _
  $region5: #{tile.8} parent=0 // pred_fallthru
    _
  %v4 = vld [vmem:[%s0] ss:$0 sm:$0xff]
  %v6 = vshra.s32 %v4, 0
  %v7 = vand.u32 %v6, 255
  %v8 = vpack.c.b16 0, %v7
  %v9 = vpack.c.b8 0, %v8
  %11 = vst [vmem:[%s1] sm:$0x1] %v9

// kernel: eq.26
$region0: #{eq.26}
  %s0 = inlined_call_operand.hbm [shape: s32[2,8], index: 0, kind: input, shape index: {}]
  %s1 = inlined_call_operand.vmem [shape: s32[16], index: 1, kind: output, shape index: {}]
  $region1: #{eq.26} parent=0
    #allocation0 [shape = 'u8[1024]{0}', space=vmem, size = 0x400, scoped, tag = 'operand span for operand 0']
    #allocation1 [shape = 's32[1]{0}', space=sflag, size = 0x4, scoped, tag = 'scoped memory for eq.26']
    #allocation2 [shape = 'u8[4096]{0}', space=vmem, size = 0x1000, scoped, tag = 'scoped mem for output reshape']
    #allocation3 [shape = 'u8[4096]{0}', space=vmem, size = 0x1000, scoped, tag = 'scoped mem for input reshape']
    %2 = vsyncpa [#allocation1], 0
    %s4 = ssub.s32 32, 32
    %5 = vsyncadd [#allocation1], %s4
    %s7 = sshll.u32 [#allocation0], 4
    %s8 = int_to_ptr.vmem [resolvable:$true] %s7
    %10 = dma.hbm_to_vmem [thread:$0]  %s0, 32, %s8, [#allocation1]
    %11 = dma.done [#allocation1], 32
    %s13 = sshllo.u32 0, 2
    %v14 = vld [vmem:[#allocation0] sm:%s13]
    %15 = vst [vmem:[#allocation3] sm:%s13] %v14
    %v16 = vld [vmem:[#allocation3] sm:$0x1]
    %vm17 = vcmask 64512
    %18 = vst.msk [vmem:[#allocation2] sm:$0x1] %vm17, %v16
    %s19 = scalar_lea.vmem [#allocation3], 1
    %v20 = vld [vmem:[%s19] sm:$0x1]
    %21 = vrot.lane.b32.xlu0 %v20, 8
    %v22 = vpop.permute.xlu0 %21
    %vm23 = vcmask 130112
    %24 = vst.msk [vmem:[#allocation2] sm:$0x1] %vm23, %v22
    %s26 = sshllo.u32 0, 1
    %v28 = vld [vmem:[#allocation2] sm:%s26]
    %s29 = sshllo.u32 0, 1
    %30 = vst [vmem:[%s1] sm:%s29] %v28
    %31 = vsyncpa [#allocation1], 1

// kernel: pairwise_forward.1
$region0: #{pairwise_forward.1}
  #allocation0 [shape = 'u32[]', space=smem, size = 0x4, offset = 0x4, fixed_abs, tag = 'smem constant byte address 0x4 - core index']
  #allocation1 [shape = 'u32[144,128]{1,0:T(1,128)}', space=vmem, size = 0x12000, scoped, tag = 'internal scratch']
  %s0 = inlined_call_operand.vmem [shape: f32[80,64], index: 0, kind: input, shape index: {}]
  %s1 = inlined_call_operand.vmem [shape: bf16[384,128], index: 1, kind: input, shape index: {}]
  %s2 = inlined_call_operand.vmem [shape: f32[36,96], index: 2, kind: input, shape index: {}]
  %s3 = inlined_call_operand.vmem [shape: f32[16,1], index: 3, kind: output, shape index: {}]
  %s4 = sld [smem:[#allocation0]]
  $region22: #{pairwise_forward.1} parent=0
    _
  %s6 = ssub.s32 1, %s4
  %s7 = scalar_select 0, %s6, %s4
  // Predicated region
  $region2: #{pairwise_forward.1} parent=0 // pred_check
    _
  $region3: #{pairwise_forward.1} parent=0 // pred_check_branch
    %9 = sbr.rel (0) target = $region5
  $region4: #{pairwise_forward.1} parent=0 // pred_region
    _
  $region5: #{pairwise_forward.1} parent=0 // pred_fallthru
    _
  // Predicated region
  $region6: #{pairwise_forward.1} parent=0 // pred_check
    _
  $region7: #{pairwise_forward.1} parent=0 // pred_check_branch
    %11 = sbr.rel (0) target = $region9
  $region8: #{pairwise_forward.1} parent=0 // pred_region
    _
  $region9: #{pairwise_forward.1} parent=0 // pred_fallthru
    _
  // Predicated region
  $region10: #{pairwise_forward.1} parent=0 // pred_check
    _
  $region11: #{pairwise_forward.1} parent=0 // pred_check_branch
    %13 = sbr.rel (0) target = $region13
  $region12: #{pairwise_forward.1} parent=0 // pred_region
    _
  $region13: #{pairwise_forward.1} parent=0 // pred_fallthru
    _
  %v15 = vld [vmem:[%s0] sm:$0xff]
  %v16 = vld [vmem:[%s0 + $0x8] sm:$0xff]
  %v17 = vpack.c.bf16 %v16, %v15
  %v18 = vld [vmem:[%s0 + $0x10] sm:$0xff]
  %v19 = vld [vmem:[%s0 + $0x18] sm:$0xff]
  %v20 = vld [vmem:[%s0 + $0x20] sm:$0xff]
  %v21 = vld [vmem:[%s0 + $0x28] sm:$0xff]
  %v22 = vld [vmem:[%s0 + $0x30] sm:$0xff]
  %v23 = vld [vmem:[%s0 + $0x38] sm:$0xff]
  %v24 = vld [vmem:[%s0 + $0x40] sm:$0xff]
  %v25 = vld [vmem:[%s0 + $0x48] sm:$0xff]
  %v26 = vld [vmem:[%s1] sm:$0xf]
  %v27 = vld [vmem:[%s1 + $0x4] sm:$0xf]
  %v28 = vld [vmem:[%s1 + $0x8] sm:$0xf]
  %v29 = vld [vmem:[%s1 + $0xc] sm:$0xf]
  %v30 = vld [vmem:[%s1 + $0x10] sm:$0xf]
  %v31 = vld [vmem:[%s1 + $0x14] sm:$0xf]
  %v32 = vld [vmem:[%s1 + $0x18] sm:$0xf]
  %v33 = vld [vmem:[%s1 + $0x1c] sm:$0xf]
  %v34 = vld [vmem:[%s2] sm:$0xff]
  %v35 = vld [vmem:[%s2 + $0x8] sm:$0xff]
  %v44 = vunpack.c.l.b16 %v26
  %v45 = vunpack.c.l.b16 %v27
  %v46 = vunpack.c.l.b16 %v28
  %v47 = vunpack.c.l.b16 %v29
  %v48 = vunpack.c.l.b16 %v30
  %v49 = vunpack.c.l.b16 %v31
  %v50 = vunpack.c.l.b16 %v32
  %v51 = vunpack.c.l.b16 %v33
  %v52 = vpack.c.b16 %v45, %v44
  %v53 = vpack.c.b16 %v47, %v46
  %v54 = vpack.c.b16 %v49, %v48
  %v55 = vpack.c.b16 %v51, %v50
  %vm60 = vcmask 523264
  %v62 = vsel %vm60, %v17, 0
  %64 = vmatprep.subr.bf16.mxu0 0
  %65 = vmatpush1.bf16.msra.mxu0 %v52
  %66 = vmatprep.subr.bf16.mxu0 0
  %67 = vmatpush1.bf16.msra.mxu0 %v53
  %68 = vmatprep.subr.bf16.mxu0 0
  %69 = vmatpush1.bf16.msra.mxu0 %v54
  %70 = vmatprep.subr.bf16.mxu0 0
  %71 = vmatpush1.bf16.msra.mxu0 %v55
  %72 = vmatprep.subr.bf16.mxu0 0
  %73 = vmatpush1.bf16.msra.mxu0 0
  %74 = vmatprep.subr.bf16.mxu0 0
  %75 = vmatpush1.bf16.msra.mxu0 0
  %76 = vmatprep.subr.bf16.mxu0 0
  %77 = vmatpush1.bf16.msra.mxu0 0
  %78 = vmatprep.subr.bf16.mxu0 0
  %79 = vmatpush1.bf16.msra.mxu0 0
  %80 = vmatprep.subr.bf16.mxu0 0
  %81 = vmatpush1.bf16.msra.mxu0 0
  %82 = vmatprep.subr.bf16.mxu0 0
  %83 = vmatpush1.bf16.msra.mxu0 0
  %84 = vmatprep.subr.bf16.mxu0 0
  %85 = vmatpush1.bf16.msra.mxu0 0
  %86 = vmatprep.subr.bf16.mxu0 0
  %87 = vmatpush1.bf16.msra.mxu0 0
  %88 = vmatprep.subr.bf16.mxu0 0
  %89 = vmatpush1.bf16.msra.mxu0 0
  %90 = vmatprep.subr.bf16.mxu0 0
  %91 = vmatpush1.bf16.msra.mxu0 0
  %92 = vmatprep.subr.bf16.mxu0 0
  %93 = vmatpush1.bf16.msra.mxu0 0
  %94 = vmatprep.subr.bf16.mxu0 0
  %95 = vmatpush1.bf16.msra.mxu0 0
  %96 = vmatprep.mubr.bf16.mxu0 0
  %97 = vmatmul.mubr.bf16.gmra.mrb[0].mxu0 %v62
  %v98 = vpop.f32.mrb[0].mxu0
  %v99 = vadd.f32 %v34, %v98
  %v100 = vpop.f32.mrb[0].mxu0
  %v101 = vpop.f32.mrb[0].mxu0
  %v102 = vadd.f32 %v35, %v101
  %v103 = vpop.f32.mrb[0].mxu0
  %104 = vdwg.mxu0
  %v105 = vld [vmem:[%s2 + $0x10] sm:$0x1]
  %v106 = vld [vmem:[%s2 + $0x11] sm:$0x1]
  %vm107 = vcmask 261120
  %v108 = vsel %vm107, %v99, 0.0
  %109 = vadd.xlane.f32.xlu0 %v108
  %v110 = vpop.xlane.xlu0 %109
  %v111 = vsel %vm107, %v102, 0.0
  %112 = vadd.xlane.f32.xlu0 %v111
  %v113 = vpop.xlane.xlu0 %112
  %v114 = vrcp.pop 32.0
  %v115 = vmul.f32 %v110, %v114
  %v116 = vmul.f32 %v113, %v114
  %v117 = vsub.f32 %v99, %v115
  %v118 = vsub.f32 %v102, %v116
  %v119 = vmul.f32 %v117, %v117
  %v120 = vmul.f32 %v118, %v118
  %v121 = vsel %vm107, %v119, 0.0
  %122 = vadd.xlane.f32.xlu0 %v121
  %v123 = vpop.xlane.xlu0 %122
  %v124 = vsel %vm107, %v120, 0.0
  %125 = vadd.xlane.f32.xlu0 %v124
  %v126 = vpop.xlane.xlu0 %125
  %v127 = vmul.f32 %v123, %v114
  %v128 = vmul.f32 %v126, %v114
  %v129 = vadd.f32 %v127, 1e-12
  %v130 = vadd.f32 %v128, 1e-12
  %v131 = vrsqrt.pop %v129
  %v132 = vrsqrt.pop %v130
  %v133 = vmul.f32 %v117, %v131
  %v134 = vmul.f32 %v118, %v132
  %v135 = vlaneseq
  %v136 = vshrl.u32 %v135, 7
  %v137 = vsub.s32 0, %v136
  %v138 = vrot.slane %v105, %v137
  %v139 = vmul.f32 %v133, %v138
  %v140 = vmul.f32 %v134, %v138
  %v141 = vlaneseq
  %v142 = vshrl.u32 %v141, 7
  %v143 = vsub.s32 0, %v142
  %v144 = vrot.slane %v106, %v143
  %v145 = vadd.f32 %v139, %v144
  %v146 = vadd.f32 %v140, %v144
  %v147 = vpack.c.bf16 %v146, %v145
  %v148 = vld [vmem:[%s1 + $0x20] sm:$0xf]
  %v149 = vld [vmem:[%s1 + $0x24] sm:$0xf]
  %v150 = vld [vmem:[%s1 + $0x28] sm:$0xf]
  %v151 = vld [vmem:[%s1 + $0x2c] sm:$0xf]
  %v152 = vld [vmem:[%s2 + $0x12] sm:$0x1]
  %v153 = vlaneseq
  %v154 = vshrl.u32 %v153, 7
  %v155 = vsub.s32 0, %v154
  %v156 = vrot.slane %v152, %v155
  %v161 = vunpack.c.l.b16 %v148
  %v162 = vunpack.c.l.b16 %v149
  %v163 = vunpack.c.l.b16 %v150
  %v164 = vunpack.c.l.b16 %v151
  %v165 = vpack.c.b16 %v162, %v161
  %v166 = vpack.c.b16 %v164, %v163
  %v170 = vsel %vm107, %v147, 0
  %172 = vmatprep.subr.bf16.mxu0 0
  %173 = vmatpush1.bf16.msra.mxu0 %v165
  %174 = vmatprep.subr.bf16.mxu0 0
  %175 = vmatpush1.bf16.msra.mxu0 %v166
  %176 = vmatprep.subr.bf16.mxu0 0
  %177 = vmatpush1.bf16.msra.mxu0 0
  %178 = vmatprep.subr.bf16.mxu0 0
  %179 = vmatpush1.bf16.msra.mxu0 0
  %180 = vmatprep.subr.bf16.mxu0 0
  %181 = vmatpush1.bf16.msra.mxu0 0
  %182 = vmatprep.subr.bf16.mxu0 0
  %183 = vmatpush1.bf16.msra.mxu0 0
  %184 = vmatprep.subr.bf16.mxu0 0
  %185 = vmatpush1.bf16.msra.mxu0 0
  %186 = vmatprep.subr.bf16.mxu0 0
  %187 = vmatpush1.bf16.msra.mxu0 0
  %188 = vmatprep.subr.bf16.mxu0 0
  %189 = vmatpush1.bf16.msra.mxu0 0
  %190 = vmatprep.subr.bf16.mxu0 0
  %191 = vmatpush1.bf16.msra.mxu0 0
  %192 = vmatprep.subr.bf16.mxu0 0
  %193 = vmatpush1.bf16.msra.mxu0 0
  %194 = vmatprep.subr.bf16.mxu0 0
  %195 = vmatpush1.bf16.msra.mxu0 0
  %196 = vmatprep.subr.bf16.mxu0 0
  %197 = vmatpush1.bf16.msra.mxu0 0
  %198 = vmatprep.subr.bf16.mxu0 0
  %199 = vmatpush1.bf16.msra.mxu0 0
  %200 = vmatprep.subr.bf16.mxu0 0
  %201 = vmatpush1.bf16.msra.mxu0 0
  %202 = vmatprep.subr.bf16.mxu0 0
  %203 = vmatpush1.bf16.msra.mxu0 0
  %204 = vmatprep.mubr.bf16.mxu0 0
  %205 = vmatmul.mubr.bf16.gmra.mrb[0].mxu0 %v170
  %v206 = vpop.f32.mrb[0].mxu0
  %v207 = vadd.f32 %v156, %v206
  %v208 = vpop.f32.mrb[0].mxu0
  %v209 = vpop.f32.mrb[0].mxu0
  %v210 = vadd.f32 %v156, %v209
  %v211 = vpop.f32.mrb[0].mxu0
  %212 = vdwg.mxu0
  %215 = vrot.lane.b32.xlu0 %v207, 120
  %v216 = vpop.permute.xlu0 %215
  %217 = vrot.lane.b32.xlu0 %v210, 120
  %v218 = vpop.permute.xlu0 %217
  %221 = vrot.lane.b32.xlu0 %v207, 112
  %v222 = vpop.permute.xlu0 %221
  %223 = vrot.lane.b32.xlu0 %v210, 112
  %v224 = vpop.permute.xlu0 %223
  %227 = vrot.lane.b32.xlu0 %v207, 104
  %v228 = vpop.permute.xlu0 %227
  %229 = vrot.lane.b32.xlu0 %v210, 104
  %v230 = vpop.permute.xlu0 %229
  %v233 = vpack.c.bf16 %v210, %v207
  %v234 = vpack.c.bf16 %v218, %v216
  %v235 = vpack.c.bf16 %v224, %v222
  %v236 = vpack.c.bf16 %v230, %v228
  %237 = vrot.lane.b32.xlu0 %v207, 96
  %v238 = vpop.permute.xlu0 %237
  %239 = vrot.lane.b32.xlu0 %v210, 96
  %v240 = vpop.permute.xlu0 %239
  %241 = vrot.lane.b32.xlu0 %v216, 96
  %v242 = vpop.permute.xlu0 %241
  %243 = vrot.lane.b32.xlu0 %v218, 96
  %v244 = vpop.permute.xlu0 %243
  %245 = vrot.lane.b32.xlu0 %v222, 96
  %v246 = vpop.permute.xlu0 %245
  %247 = vrot.lane.b32.xlu0 %v224, 96
  %v248 = vpop.permute.xlu0 %247
  %249 = vrot.lane.b32.xlu0 %v228, 96
  %v250 = vpop.permute.xlu0 %249
  %251 = vrot.lane.b32.xlu0 %v230, 96
  %v252 = vpop.permute.xlu0 %251
  %261 = vxpose.xlu0.b32.start [1/16] %v238, 128
  %262 = vxpose.xlu0.b32.cont [2/16] %v240, 128
  %263 = vxpose.xlu0.b32.cont [3/16] %v242, 128
  %264 = vxpose.xlu0.b32.cont [4/16] %v244, 128
  %265 = vxpose.xlu0.b32.cont [5/16] %v246, 128
  %266 = vxpose.xlu0.b32.cont [6/16] %v248, 128
  %267 = vxpose.xlu0.b32.cont [7/16] %v250, 128
  %268 = vxpose.xlu0.b32.cont [8/16] %v252, 128
  %269 = vxpose.xlu0.b32.cont [9/16] 0.0, 128
  %270 = vxpose.xlu0.b32.cont [10/16] 0.0, 128
  %271 = vxpose.xlu0.b32.cont [11/16] 0.0, 128
  %272 = vxpose.xlu0.b32.cont [12/16] 0.0, 128
  %273 = vxpose.xlu0.b32.cont [13/16] 0.0, 128
  %274 = vxpose.xlu0.b32.cont [14/16] 0.0, 128
  %275 = vxpose.xlu0.b32.cont [15/16] 0.0, 128
  %276 = vxpose.xlu0.b32.end [16/16] 0.0, 128
  %v277 = vpop.trf.xlu0
  %v278 = vpop.trf.xlu0
  %v279 = vpop.trf.xlu0
  %v280 = vpop.trf.xlu0
  %v281 = vpop.trf.xlu0
  %v282 = vpop.trf.xlu0
  %v283 = vpop.trf.xlu0
  %v284 = vpop.trf.xlu0
  %v285 = vpop.trf.xlu0
  %v286 = vpop.trf.xlu0
  %v287 = vpop.trf.xlu0
  %v288 = vpop.trf.xlu0
  %v289 = vpop.trf.xlu0
  %v290 = vpop.trf.xlu0
  %v291 = vpop.trf.xlu0
  %v292 = vpop.trf.xlu0
  %v293 = vpack.c.bf16 %v277, %v277
  %vm294 = vcmask 64512
  %v296 = vsel %vm294, %v233, 0
  %v299 = vsel %vm294, %v234, 0
  %v302 = vsel %vm294, %v235, 0
  %v305 = vsel %vm294, %v236, 0
  %vm307 = vcmask 1043456
  %v309 = vsel %vm307, %v293, 0
  %311 = vmatprep.subr.bf16.mxu0 0
  %312 = vmatpush1.bf16.msra.mxu0 %v309
  %313 = vmatprep.subr.bf16.mxu0 0
  %314 = vmatpush1.bf16.msra.mxu0 0
  %315 = vmatprep.subr.bf16.mxu0 0
  %316 = vmatpush1.bf16.msra.mxu0 0
  %317 = vmatprep.subr.bf16.mxu0 0
  %318 = vmatpush1.bf16.msra.mxu0 0
  %319 = vmatprep.subr.bf16.mxu0 0
  %320 = vmatpush1.bf16.msra.mxu0 0
  %321 = vmatprep.subr.bf16.mxu0 0
  %322 = vmatpush1.bf16.msra.mxu0 0
  %323 = vmatprep.subr.bf16.mxu0 0
  %324 = vmatpush1.bf16.msra.mxu0 0
  %325 = vmatprep.subr.bf16.mxu0 0
  %326 = vmatpush1.bf16.msra.mxu0 0
  %327 = vmatprep.subr.bf16.mxu0 0
  %328 = vmatpush1.bf16.msra.mxu0 0
  %329 = vmatprep.subr.bf16.mxu0 0
  %330 = vmatpush1.bf16.msra.mxu0 0
  %331 = vmatprep.subr.bf16.mxu0 0
  %332 = vmatpush1.bf16.msra.mxu0 0
  %333 = vmatprep.subr.bf16.mxu0 0
  %334 = vmatpush1.bf16.msra.mxu0 0
  %335 = vmatprep.subr.bf16.mxu0 0
  %336 = vmatpush1.bf16.msra.mxu0 0
  %337 = vmatprep.subr.bf16.mxu0 0
  %338 = vmatpush1.bf16.msra.mxu0 0
  %339 = vmatprep.subr.bf16.mxu0 0
  %340 = vmatpush1.bf16.msra.mxu0 0
  %341 = vmatprep.subr.bf16.mxu0 0
  %342 = vmatpush1.bf16.msra.mxu0 0
  %343 = vmatprep.mubr.bf16.mxu0 0
  %344 = vmatmul.mubr.bf16.gmra.mrb[0].mxu0 %v296
  %v345 = vpop.f32.mrb[0].mxu0
  %v346 = vadd.f32 %v18, %v345
  %v347 = vpop.f32.mrb[0].mxu0
  %v348 = vpop.f32.mrb[0].mxu0
  %v349 = vadd.f32 %v19, %v348
  %v350 = vpop.f32.mrb[0].mxu0
  %351 = vmatprep.mubr.bf16.mxu0 0
  %352 = vmatmul.mubr.bf16.gmra.mrb[0].mxu0 %v299
  %v353 = vpop.f32.mrb[0].mxu0
  %v354 = vadd.f32 %v20, %v353
  %v355 = vpop.f32.mrb[0].mxu0
  %v356 = vpop.f32.mrb[0].mxu0
  %v357 = vadd.f32 %v21, %v356
  %v358 = vpop.f32.mrb[0].mxu0
  %359 = vmatprep.mubr.bf16.mxu0 0
  %360 = vmatmul.mubr.bf16.gmra.mrb[0].mxu0 %v302
  %v361 = vpop.f32.mrb[0].mxu0
  %v362 = vadd.f32 %v22, %v361
  %v363 = vpop.f32.mrb[0].mxu0
  %v364 = vpop.f32.mrb[0].mxu0
  %v365 = vadd.f32 %v23, %v364
  %v366 = vpop.f32.mrb[0].mxu0
  %367 = vmatprep.mubr.bf16.mxu0 0
  %368 = vmatmul.mubr.bf16.gmra.mrb[0].mxu0 %v305
  %v369 = vpop.f32.mrb[0].mxu0
  %v370 = vadd.f32 %v24, %v369
  %v371 = vpop.f32.mrb[0].mxu0
  %v372 = vpop.f32.mrb[0].mxu0
  %v373 = vadd.f32 %v25, %v372
  %v374 = vpop.f32.mrb[0].mxu0
  %375 = vdwg.mxu0
  %v376 = vsel %vm60, %v346, -inf
  %377 = vmax.xlane.f32.xlu0 %v376
  %v378 = vpop.xlane.xlu0 %377
  %v379 = vsel %vm60, %v349, -inf
  %380 = vmax.xlane.f32.xlu0 %v379
  %v381 = vpop.xlane.xlu0 %380
  %v382 = vsel %vm60, %v354, -inf
  %383 = vmax.xlane.f32.xlu0 %v382
  %v384 = vpop.xlane.xlu0 %383
  %v385 = vsel %vm60, %v357, -inf
  %386 = vmax.xlane.f32.xlu0 %v385
  %v387 = vpop.xlane.xlu0 %386
  %v388 = vsel %vm60, %v362, -inf
  %389 = vmax.xlane.f32.xlu0 %v388
  %v390 = vpop.xlane.xlu0 %389
  %v391 = vsel %vm60, %v365, -inf
  %392 = vmax.xlane.f32.xlu0 %v391
  %v393 = vpop.xlane.xlu0 %392
  %v394 = vsel %vm60, %v370, -inf
  %395 = vmax.xlane.f32.xlu0 %v394
  %v396 = vpop.xlane.xlu0 %395
  %v397 = vsel %vm60, %v373, -inf
  %398 = vmax.xlane.f32.xlu0 %v397
  %v399 = vpop.xlane.xlu0 %398
  %v400 = vsub.f32 %v346, %v378
  %v401 = vsub.f32 %v349, %v381
  %v402 = vsub.f32 %v354, %v384
  %v403 = vsub.f32 %v357, %v387
  %v404 = vsub.f32 %v362, %v390
  %v405 = vsub.f32 %v365, %v393
  %v406 = vsub.f32 %v370, %v396
  %v407 = vsub.f32 %v373, %v399
  %v408 = vmul.f32 %v400, 1.442695
  %v409 = vpow.pop %v408
  %v410 = vmul.f32 %v401, 1.442695
  %v411 = vpow.pop %v410
  %v412 = vmul.f32 %v402, 1.442695
  %v413 = vpow.pop %v412
  %v414 = vmul.f32 %v403, 1.442695
  %v415 = vpow.pop %v414
  %v416 = vmul.f32 %v404, 1.442695
  %v417 = vpow.pop %v416
  %v418 = vmul.f32 %v405, 1.442695
  %v419 = vpow.pop %v418
  %v420 = vmul.f32 %v406, 1.442695
  %v421 = vpow.pop %v420
  %v422 = vmul.f32 %v407, 1.442695
  %v423 = vpow.pop %v422
  %v424 = vsel %vm60, %v409, 0.0
  %425 = vadd.xlane.f32.xlu0 %v424
  %v426 = vpop.xlane.xlu0 %425
  %v427 = vsel %vm60, %v411, 0.0
  %428 = vadd.xlane.f32.xlu0 %v427
  %v429 = vpop.xlane.xlu0 %428
  %v430 = vsel %vm60, %v413, 0.0
  %431 = vadd.xlane.f32.xlu0 %v430
  %v432 = vpop.xlane.xlu0 %431
  %v433 = vsel %vm60, %v415, 0.0
  %434 = vadd.xlane.f32.xlu0 %v433
  %v435 = vpop.xlane.xlu0 %434
  %v436 = vsel %vm60, %v417, 0.0
  %437 = vadd.xlane.f32.xlu0 %v436
  %v438 = vpop.xlane.xlu0 %437
  %v439 = vsel %vm60, %v419, 0.0
  %440 = vadd.xlane.f32.xlu0 %v439
  %v441 = vpop.xlane.xlu0 %440
  %v442 = vsel %vm60, %v421, 0.0
  %443 = vadd.xlane.f32.xlu0 %v442
  %v444 = vpop.xlane.xlu0 %443
  %v445 = vsel %vm60, %v423, 0.0
  %446 = vadd.xlane.f32.xlu0 %v445
  %v447 = vpop.xlane.xlu0 %446
  %v448 = vrcp.pop %v426
  %v449 = vrcp.pop %v429
  %v450 = vrcp.pop %v432
  %v451 = vrcp.pop %v435
  %v452 = vrcp.pop %v438
  %v453 = vrcp.pop %v441
  %v454 = vrcp.pop %v444
  %v455 = vrcp.pop %v447
  %v456 = vmul.f32 %v409, %v448
  %v457 = vmul.f32 %v411, %v449
  %v458 = vmul.f32 %v413, %v450
  %v459 = vmul.f32 %v415, %v451
  %v460 = vmul.f32 %v417, %v452
  %v461 = vmul.f32 %v419, %v453
  %v462 = vmul.f32 %v421, %v454
  %v463 = vmul.f32 %v423, %v455
  %v464 = vpack.c.bf16 %v457, %v456
  %v465 = vpack.c.bf16 %v459, %v458
  %v466 = vpack.c.bf16 %v461, %v460
  %v467 = vpack.c.bf16 %v463, %v462
  %472 = vrot.lane.b32.xlu0 %v233, 64
  %v473 = vpop.permute.xlu0 %472
  %474 = vrot.lane.b32.xlu0 %v234, 64
  %v475 = vpop.permute.xlu0 %474
  %476 = vrot.lane.b32.xlu0 %v235, 64
  %v477 = vpop.permute.xlu0 %476
  %478 = vrot.lane.b32.xlu0 %v236, 64
  %v479 = vpop.permute.xlu0 %478
  %v485 = vsel %vm60, %v464, 0
  %v488 = vsel %vm60, %v465, 0
  %v491 = vsel %vm60, %v466, 0
  %v494 = vsel %vm60, %v467, 0
  %496 = vmatprep.subr.bf16.mxu0 0
  %497 = vmatpush1.bf16.msra.mxu0 %v473
  %498 = vmatprep.subr.bf16.mxu0 0
  %499 = vmatpush1.bf16.msra.mxu0 %v475
  %500 = vmatprep.subr.bf16.mxu0 0
  %501 = vmatpush1.bf16.msra.mxu0 %v477
  %502 = vmatprep.subr.bf16.mxu0 0
  %503 = vmatpush1.bf16.msra.mxu0 %v479
  %504 = vmatprep.subr.bf16.mxu0 0
  %505 = vmatpush1.bf16.msra.mxu0 0
  %506 = vmatprep.subr.bf16.mxu0 0
  %507 = vmatpush1.bf16.msra.mxu0 0
  %508 = vmatprep.subr.bf16.mxu0 0
  %509 = vmatpush1.bf16.msra.mxu0 0
  %510 = vmatprep.subr.bf16.mxu0 0
  %511 = vmatpush1.bf16.msra.mxu0 0
  %512 = vmatprep.subr.bf16.mxu0 0
  %513 = vmatpush1.bf16.msra.mxu0 0
  %514 = vmatprep.subr.bf16.mxu0 0
  %515 = vmatpush1.bf16.msra.mxu0 0
  %516 = vmatprep.subr.bf16.mxu0 0
  %517 = vmatpush1.bf16.msra.mxu0 0
  %518 = vmatprep.subr.bf16.mxu0 0
  %519 = vmatpush1.bf16.msra.mxu0 0
  %520 = vmatprep.subr.bf16.mxu0 0
  %521 = vmatpush1.bf16.msra.mxu0 0
  %522 = vmatprep.subr.bf16.mxu0 0
  %523 = vmatpush1.bf16.msra.mxu0 0
  %524 = vmatprep.subr.bf16.mxu0 0
  %525 = vmatpush1.bf16.msra.mxu0 0
  %526 = vmatprep.subr.bf16.mxu0 0
  %527 = vmatpush1.bf16.msra.mxu0 0
  %528 = vmatprep.mubr.bf16.mxu0 0
  %529 = vmatmul.mubr.bf16.gmra.mrb[0].mxu0 %v485
  %v530 = vpop.f32.mrb[0].mxu0
  %v531 = vadd.f32 0.0, %v530
  %v532 = vpop.f32.mrb[0].mxu0
  %v533 = vpop.f32.mrb[0].mxu0
  %v534 = vadd.f32 0.0, %v533
  %v535 = vpop.f32.mrb[0].mxu0
  %536 = vmatprep.mubr.bf16.mxu0 0
  %537 = vmatmul.mubr.bf16.gmra.mrb[0].mxu0 %v488
  %v538 = vpop.f32.mrb[0].mxu0
  %v539 = vadd.f32 0.0, %v538
  %v540 = vpop.f32.mrb[0].mxu0
  %v541 = vpop.f32.mrb[0].mxu0
  %v542 = vadd.f32 0.0, %v541
  %v543 = vpop.f32.mrb[0].mxu0
  %544 = vmatprep.mubr.bf16.mxu0 0
  %545 = vmatmul.mubr.bf16.gmra.mrb[0].mxu0 %v491
  %v546 = vpop.f32.mrb[0].mxu0
  %v547 = vadd.f32 0.0, %v546
  %v548 = vpop.f32.mrb[0].mxu0
  %v549 = vpop.f32.mrb[0].mxu0
  %v550 = vadd.f32 0.0, %v549
  %v551 = vpop.f32.mrb[0].mxu0
  %552 = vmatprep.mubr.bf16.mxu0 0
  %553 = vmatmul.mubr.bf16.gmra.mrb[0].mxu0 %v494
  %v554 = vpop.f32.mrb[0].mxu0
  %v555 = vadd.f32 0.0, %v554
  %v556 = vpop.f32.mrb[0].mxu0
  %v557 = vpop.f32.mrb[0].mxu0
  %v558 = vadd.f32 0.0, %v557
  %v559 = vpop.f32.mrb[0].mxu0
  %560 = vdwg.mxu0
  %563 = vrot.lane.b32.xlu0 %v539, 8
  %v564 = vpop.permute.xlu0 %563
  %565 = vrot.lane.b32.xlu0 %v542, 8
  %v566 = vpop.permute.xlu0 %565
  %571 = vrot.lane.b32.xlu0 %v547, 16
  %v572 = vpop.permute.xlu0 %571
  %573 = vrot.lane.b32.xlu0 %v550, 16
  %v574 = vpop.permute.xlu0 %573
  %579 = vrot.lane.b32.xlu0 %v555, 24
  %v580 = vpop.permute.xlu0 %579
  %581 = vrot.lane.b32.xlu0 %v558, 24
  %v582 = vpop.permute.xlu0 %581
  %v585 = vsel %vm294, %v531, %v564
  %v586 = vsel %vm294, %v534, %v566
  %vm587 = vcmask 130048
  %v588 = vsel %vm587, %v585, %v572
  %v589 = vsel %vm587, %v586, %v574
  %vm590 = vcmask 195584
  %v591 = vsel %vm590, %v588, %v580
  %v592 = vsel %vm590, %v589, %v582
  %v593 = vpack.c.bf16 %v592, %v591
  %v594 = vld [vmem:[%s1 + $0x30] sm:$0xf]
  %v595 = vld [vmem:[%s1 + $0x34] sm:$0xf]
  %v596 = vld [vmem:[%s1 + $0x38] sm:$0xf]
  %v597 = vld [vmem:[%s1 + $0x3c] sm:$0xf]
  %v598 = vld [vmem:[%s2 + $0x13] sm:$0x1]
  %v599 = vlaneseq
  %v600 = vshrl.u32 %v599, 7
  %v601 = vsub.s32 0, %v600
  %v602 = vrot.slane %v598, %v601
  %v607 = vunpack.c.l.b16 %v594
  %v608 = vunpack.c.l.b16 %v595
  %v609 = vunpack.c.l.b16 %v596
  %v610 = vunpack.c.l.b16 %v597
  %v611 = vpack.c.b16 %v608, %v607
  %v612 = vpack.c.b16 %v610, %v609
  %v616 = vsel %vm107, %v593, 0
  %618 = vmatprep.subr.bf16.mxu0 0
  %619 = vmatpush1.bf16.msra.mxu0 %v611
  %620 = vmatprep.subr.bf16.mxu0 0
  %621 = vmatpush1.bf16.msra.mxu0 %v612
  %622 = vmatprep.subr.bf16.mxu0 0
  %623 = vmatpush1.bf16.msra.mxu0 0
  %624 = vmatprep.subr.bf16.mxu0 0
  %625 = vmatpush1.bf16.msra.mxu0 0
  %626 = vmatprep.subr.bf16.mxu0 0
  %627 = vmatpush1.bf16.msra.mxu0 0
  %628 = vmatprep.subr.bf16.mxu0 0
  %629 = vmatpush1.bf16.msra.mxu0 0
  %630 = vmatprep.subr.bf16.mxu0 0
  %631 = vmatpush1.bf16.msra.mxu0 0
  %632 = vmatprep.subr.bf16.mxu0 0
  %633 = vmatpush1.bf16.msra.mxu0 0
  %634 = vmatprep.subr.bf16.mxu0 0
  %635 = vmatpush1.bf16.msra.mxu0 0
  %636 = vmatprep.subr.bf16.mxu0 0
  %637 = vmatpush1.bf16.msra.mxu0 0
  %638 = vmatprep.subr.bf16.mxu0 0
  %639 = vmatpush1.bf16.msra.mxu0 0
  %640 = vmatprep.subr.bf16.mxu0 0
  %641 = vmatpush1.bf16.msra.mxu0 0
  %642 = vmatprep.subr.bf16.mxu0 0
  %643 = vmatpush1.bf16.msra.mxu0 0
  %644 = vmatprep.subr.bf16.mxu0 0
  %645 = vmatpush1.bf16.msra.mxu0 0
  %646 = vmatprep.subr.bf16.mxu0 0
  %647 = vmatpush1.bf16.msra.mxu0 0
  %648 = vmatprep.subr.bf16.mxu0 0
  %649 = vmatpush1.bf16.msra.mxu0 0
  %650 = vmatprep.mubr.bf16.mxu0 0
  %651 = vmatmul.mubr.bf16.gmra.mrb[0].mxu0 %v616
  %v652 = vpop.f32.mrb[0].mxu0
  %v653 = vadd.f32 %v602, %v652
  %v654 = vpop.f32.mrb[0].mxu0
  %v655 = vpop.f32.mrb[0].mxu0
  %v656 = vadd.f32 %v602, %v655
  %v657 = vpop.f32.mrb[0].mxu0
  %658 = vdwg.mxu0
  %v659 = vadd.f32 %v145, %v653
  %v660 = vadd.f32 %v146, %v656
  %v661 = vld [vmem:[%s2 + $0x14] sm:$0x1]
  %v662 = vld [vmem:[%s2 + $0x15] sm:$0x1]
  %v663 = vsel %vm107, %v659, 0.0
  %664 = vadd.xlane.f32.xlu0 %v663
  %v665 = vpop.xlane.xlu0 %664
  %v666 = vsel %vm107, %v660, 0.0
  %667 = vadd.xlane.f32.xlu0 %v666
  %v668 = vpop.xlane.xlu0 %667
  %v669 = vmul.f32 %v665, %v114
  %v670 = vmul.f32 %v668, %v114
  %v671 = vsub.f32 %v659, %v669
  %v672 = vsub.f32 %v660, %v670
  %v673 = vmul.f32 %v671, %v671
  %v674 = vmul.f32 %v672, %v672
  %v675 = vsel %vm107, %v673, 0.0
  %676 = vadd.xlane.f32.xlu0 %v675
  %v677 = vpop.xlane.xlu0 %676
  %v678 = vsel %vm107, %v674, 0.0
  %679 = vadd.xlane.f32.xlu0 %v678
  %v680 = vpop.xlane.xlu0 %679
  %v681 = vmul.f32 %v677, %v114
  %v682 = vmul.f32 %v680, %v114
  %v683 = vadd.f32 %v681, 1e-12
  %v684 = vadd.f32 %v682, 1e-12
  %v685 = vrsqrt.pop %v683
  %v686 = vrsqrt.pop %v684
  %v687 = vmul.f32 %v671, %v685
  %v688 = vmul.f32 %v672, %v686
  %v689 = vlaneseq
  %v690 = vshrl.u32 %v689, 7
  %v691 = vsub.s32 0, %v690
  %v692 = vrot.slane %v661, %v691
  %v693 = vmul.f32 %v687, %v692
  %v694 = vmul.f32 %v688, %v692
  %v695 = vlaneseq
  %v696 = vshrl.u32 %v695, 7
  %v697 = vsub.s32 0, %v696
  %v698 = vrot.slane %v662, %v697
  %v699 = vadd.f32 %v693, %v698
  %v700 = vadd.f32 %v694, %v698
  %v701 = vpack.c.bf16 %v700, %v699
  %v702 = vld [vmem:[%s1 + $0x40] sm:$0xf]
  %v703 = vld [vmem:[%s1 + $0x44] sm:$0xf]
  %v704 = vld [vmem:[%s1 + $0x48] sm:$0xf]
  %v705 = vld [vmem:[%s1 + $0x4c] sm:$0xf]
  %v706 = vld [vmem:[%s2 + $0x16] sm:$0x1]
  %v707 = vlaneseq
  %v708 = vshrl.u32 %v707, 7
  %v709 = vsub.s32 0, %v708
  %v710 = vrot.slane %v706, %v709
  %v715 = vunpack.c.l.b16 %v702
  %v716 = vunpack.c.l.b16 %v703
  %v717 = vunpack.c.l.b16 %v704
  %v718 = vunpack.c.l.b16 %v705
  %v719 = vpack.c.b16 %v716, %v715
  %v720 = vpack.c.b16 %v718, %v717
  %v724 = vsel %vm107, %v701, 0
  %726 = vmatprep.subr.bf16.mxu0 0
  %727 = vmatpush1.bf16.msra.mxu0 %v719
  %728 = vmatprep.subr.bf16.mxu0 0
  %729 = vmatpush1.bf16.msra.mxu0 %v720
  %730 = vmatprep.subr.bf16.mxu0 0
  %731 = vmatpush1.bf16.msra.mxu0 0
  %732 = vmatprep.subr.bf16.mxu0 0
  %733 = vmatpush1.bf16.msra.mxu0 0
  %734 = vmatprep.subr.bf16.mxu0 0
  %735 = vmatpush1.bf16.msra.mxu0 0
  %736 = vmatprep.subr.bf16.mxu0 0
  %737 = vmatpush1.bf16.msra.mxu0 0
  %738 = vmatprep.subr.bf16.mxu0 0
  %739 = vmatpush1.bf16.msra.mxu0 0
  %740 = vmatprep.subr.bf16.mxu0 0
  %741 = vmatpush1.bf16.msra.mxu0 0
  %742 = vmatprep.subr.bf16.mxu0 0
  %743 = vmatpush1.bf16.msra.mxu0 0
  %744 = vmatprep.subr.bf16.mxu0 0
  %745 = vmatpush1.bf16.msra.mxu0 0
  %746 = vmatprep.subr.bf16.mxu0 0
  %747 = vmatpush1.bf16.msra.mxu0 0
  %748 = vmatprep.subr.bf16.mxu0 0
  %749 = vmatpush1.bf16.msra.mxu0 0
  %750 = vmatprep.subr.bf16.mxu0 0
  %751 = vmatpush1.bf16.msra.mxu0 0
  %752 = vmatprep.subr.bf16.mxu0 0
  %753 = vmatpush1.bf16.msra.mxu0 0
  %754 = vmatprep.subr.bf16.mxu0 0
  %755 = vmatpush1.bf16.msra.mxu0 0
  %756 = vmatprep.subr.bf16.mxu0 0
  %757 = vmatpush1.bf16.msra.mxu0 0
  %758 = vmatprep.mubr.bf16.mxu0 0
  %759 = vmatmul.mubr.bf16.gmra.mrb[0].mxu0 %v724
  %v760 = vpop.f32.mrb[0].mxu0
  %v761 = vadd.f32 %v710, %v760
  %v762 = vpop.f32.mrb[0].mxu0
  %v763 = vpop.f32.mrb[0].mxu0
  %v764 = vadd.f32 %v710, %v763
  %v765 = vpop.f32.mrb[0].mxu0
  %766 = vdwg.mxu0
  %v767 = vmul.f32 %v761, 0.5
  %v768 = vmul.f32 %v764, 0.5
  %v769 = vmul.f32 %v761, %v761
  %v770 = vmul.f32 %v764, %v764
  %v771 = vmul.f32 %v761, %v769
  %v772 = vmul.f32 %v764, %v770
  %v773 = vmul.f32 %v771, 0.044715
  %v774 = vmul.f32 %v772, 0.044715
  %v775 = vadd.f32 %v761, %v773
  %v776 = vadd.f32 %v764, %v774
  %v777 = vmul.f32 %v775, 0.7978846
  %v778 = vmul.f32 %v776, 0.7978846
  %v779 = vtanh.pop %v777
  %v780 = vtanh.pop %v778
  %v781 = vadd.f32 %v779, 1.0
  %v782 = vadd.f32 %v780, 1.0
  %v783 = vmul.f32 %v767, %v781
  %v784 = vmul.f32 %v768, %v782
  %v785 = vpack.c.bf16 %v784, %v783
  %v786 = vld [vmem:[%s1 + $0x50] sm:$0xf]
  %v787 = vld [vmem:[%s1 + $0x54] sm:$0xf]
  %v788 = vld [vmem:[%s1 + $0x58] sm:$0xf]
  %v789 = vld [vmem:[%s1 + $0x5c] sm:$0xf]
  %v790 = vld [vmem:[%s1 + $0x60] sm:$0xf]
  %v791 = vld [vmem:[%s1 + $0x64] sm:$0xf]
  %v792 = vld [vmem:[%s1 + $0x68] sm:$0xf]
  %v793 = vld [vmem:[%s1 + $0x6c] sm:$0xf]
  %v794 = vld [vmem:[%s2 + $0x17] sm:$0x1]
  %v795 = vlaneseq
  %v796 = vshrl.u32 %v795, 7
  %v797 = vsub.s32 0, %v796
  %v798 = vrot.slane %v794, %v797
  %v807 = vunpack.c.l.b16 %v786
  %v808 = vunpack.c.l.b16 %v787
  %v809 = vunpack.c.l.b16 %v788
  %v810 = vunpack.c.l.b16 %v789
  %v811 = vunpack.c.l.b16 %v790
  %v812 = vunpack.c.l.b16 %v791
  %v813 = vunpack.c.l.b16 %v792
  %v814 = vunpack.c.l.b16 %v793
  %v815 = vpack.c.b16 %v808, %v807
  %v816 = vpack.c.b16 %v810, %v809
  %v817 = vpack.c.b16 %v812, %v811
  %v818 = vpack.c.b16 %v814, %v813
  %v824 = vsel %vm60, %v785, 0
  %826 = vmatprep.subr.bf16.mxu0 0
  %827 = vmatpush1.bf16.msra.mxu0 %v815
  %828 = vmatprep.subr.bf16.mxu0 0
  %829 = vmatpush1.bf16.msra.mxu0 %v816
  %830 = vmatprep.subr.bf16.mxu0 0
  %831 = vmatpush1.bf16.msra.mxu0 %v817
  %832 = vmatprep.subr.bf16.mxu0 0
  %833 = vmatpush1.bf16.msra.mxu0 %v818
  %834 = vmatprep.subr.bf16.mxu0 0
  %835 = vmatpush1.bf16.msra.mxu0 0
  %836 = vmatprep.subr.bf16.mxu0 0
  %837 = vmatpush1.bf16.msra.mxu0 0
  %838 = vmatprep.subr.bf16.mxu0 0
  %839 = vmatpush1.bf16.msra.mxu0 0
  %840 = vmatprep.subr.bf16.mxu0 0
  %841 = vmatpush1.bf16.msra.mxu0 0
  %842 = vmatprep.subr.bf16.mxu0 0
  %843 = vmatpush1.bf16.msra.mxu0 0
  %844 = vmatprep.subr.bf16.mxu0 0
  %845 = vmatpush1.bf16.msra.mxu0 0
  %846 = vmatprep.subr.bf16.mxu0 0
  %847 = vmatpush1.bf16.msra.mxu0 0
  %848 = vmatprep.subr.bf16.mxu0 0
  %849 = vmatpush1.bf16.msra.mxu0 0
  %850 = vmatprep.subr.bf16.mxu0 0
  %851 = vmatpush1.bf16.msra.mxu0 0
  %852 = vmatprep.subr.bf16.mxu0 0
  %853 = vmatpush1.bf16.msra.mxu0 0
  %854 = vmatprep.subr.bf16.mxu0 0
  %855 = vmatpush1.bf16.msra.mxu0 0
  %856 = vmatprep.subr.bf16.mxu0 0
  %857 = vmatpush1.bf16.msra.mxu0 0
  %858 = vmatprep.mubr.bf16.mxu0 0
  %859 = vmatmul.mubr.bf16.gmra.mrb[0].mxu0 %v824
  %v860 = vpop.f32.mrb[0].mxu0
  %v861 = vadd.f32 %v798, %v860
  %v862 = vpop.f32.mrb[0].mxu0
  %v863 = vpop.f32.mrb[0].mxu0
  %v864 = vadd.f32 %v798, %v863
  %v865 = vpop.f32.mrb[0].mxu0
  %866 = vdwg.mxu0
  %v867 = vadd.f32 %v699, %v861
  %v868 = vadd.f32 %v700, %v864
  %v869 = vld [vmem:[%s2 + $0x18] sm:$0x1]
  %v870 = vld [vmem:[%s2 + $0x19] sm:$0x1]
  %v871 = vsel %vm107, %v867, 0.0
  %872 = vadd.xlane.f32.xlu0 %v871
  %v873 = vpop.xlane.xlu0 %872
  %v874 = vsel %vm107, %v868, 0.0
  %875 = vadd.xlane.f32.xlu0 %v874
  %v876 = vpop.xlane.xlu0 %875
  %v877 = vmul.f32 %v873, %v114
  %v878 = vmul.f32 %v876, %v114
  %v879 = vsub.f32 %v867, %v877
  %v880 = vsub.f32 %v868, %v878
  %v881 = vmul.f32 %v879, %v879
  %v882 = vmul.f32 %v880, %v880
  %v883 = vsel %vm107, %v881, 0.0
  %884 = vadd.xlane.f32.xlu0 %v883
  %v885 = vpop.xlane.xlu0 %884
  %v886 = vsel %vm107, %v882, 0.0
  %887 = vadd.xlane.f32.xlu0 %v886
  %v888 = vpop.xlane.xlu0 %887
  %v889 = vmul.f32 %v885, %v114
  %v890 = vmul.f32 %v888, %v114
  %v891 = vadd.f32 %v889, 1e-12
  %v892 = vadd.f32 %v890, 1e-12
  %v893 = vrsqrt.pop %v891
  %v894 = vrsqrt.pop %v892
  %v895 = vmul.f32 %v879, %v893
  %v896 = vmul.f32 %v880, %v894
  %v897 = vlaneseq
  %v898 = vshrl.u32 %v897, 7
  %v899 = vsub.s32 0, %v898
  %v900 = vrot.slane %v869, %v899
  %v901 = vmul.f32 %v895, %v900
  %v902 = vmul.f32 %v896, %v900
  %v903 = vlaneseq
  %v904 = vshrl.u32 %v903, 7
  %v905 = vsub.s32 0, %v904
  %v906 = vrot.slane %v870, %v905
  %v907 = vadd.f32 %v901, %v906
  %v908 = vadd.f32 %v902, %v906
  %v909 = vpack.c.bf16 %v908, %v907
  %v910 = vld [vmem:[%s1 + $0x70] sm:$0xf]
  %v911 = vld [vmem:[%s1 + $0x74] sm:$0xf]
  %v912 = vld [vmem:[%s1 + $0x78] sm:$0xf]
  %v913 = vld [vmem:[%s1 + $0x7c] sm:$0xf]
  %v914 = vld [vmem:[%s2 + $0x1a] sm:$0x1]
  %v915 = vlaneseq
  %v916 = vshrl.u32 %v915, 7
  %v917 = vsub.s32 0, %v916
  %v918 = vrot.slane %v914, %v917
  %v923 = vunpack.c.l.b16 %v910
  %v924 = vunpack.c.l.b16 %v911
  %v925 = vunpack.c.l.b16 %v912
  %v926 = vunpack.c.l.b16 %v913
  %v927 = vpack.c.b16 %v924, %v923
  %v928 = vpack.c.b16 %v926, %v925
  %v932 = vsel %vm107, %v909, 0
  %934 = vmatprep.subr.bf16.mxu0 0
  %935 = vmatpush1.bf16.msra.mxu0 %v927
  %936 = vmatprep.subr.bf16.mxu0 0
  %937 = vmatpush1.bf16.msra.mxu0 %v928
  %938 = vmatprep.subr.bf16.mxu0 0
  %939 = vmatpush1.bf16.msra.mxu0 0
  %940 = vmatprep.subr.bf16.mxu0 0
  %941 = vmatpush1.bf16.msra.mxu0 0
  %942 = vmatprep.subr.bf16.mxu0 0
  %943 = vmatpush1.bf16.msra.mxu0 0
  %944 = vmatprep.subr.bf16.mxu0 0
  %945 = vmatpush1.bf16.msra.mxu0 0
  %946 = vmatprep.subr.bf16.mxu0 0
  %947 = vmatpush1.bf16.msra.mxu0 0
  %948 = vmatprep.subr.bf16.mxu0 0
  %949 = vmatpush1.bf16.msra.mxu0 0
  %950 = vmatprep.subr.bf16.mxu0 0
  %951 = vmatpush1.bf16.msra.mxu0 0
  %952 = vmatprep.subr.bf16.mxu0 0
  %953 = vmatpush1.bf16.msra.mxu0 0
  %954 = vmatprep.subr.bf16.mxu0 0
  %955 = vmatpush1.bf16.msra.mxu0 0
  %956 = vmatprep.subr.bf16.mxu0 0
  %957 = vmatpush1.bf16.msra.mxu0 0
  %958 = vmatprep.subr.bf16.mxu0 0
  %959 = vmatpush1.bf16.msra.mxu0 0
  %960 = vmatprep.subr.bf16.mxu0 0
  %961 = vmatpush1.bf16.msra.mxu0 0
  %962 = vmatprep.subr.bf16.mxu0 0
  %963 = vmatpush1.bf16.msra.mxu0 0
  %964 = vmatprep.subr.bf16.mxu0 0
  %965 = vmatpush1.bf16.msra.mxu0 0
  %966 = vmatprep.mubr.bf16.mxu0 0
  %967 = vmatmul.mubr.bf16.gmra.mrb[0].mxu0 %v932
  %v968 = vpop.f32.mrb[0].mxu0
  %v969 = vadd.f32 %v918, %v968
  %v970 = vpop.f32.mrb[0].mxu0
  %v971 = vpop.f32.mrb[0].mxu0
  %v972 = vadd.f32 %v918, %v971
  %v973 = vpop.f32.mrb[0].mxu0
  %974 = vdwg.mxu0
  %977 = vrot.lane.b32.xlu0 %v969, 120
  %v978 = vpop.permute.xlu0 %977
  %979 = vrot.lane.b32.xlu0 %v972, 120
  %v980 = vpop.permute.xlu0 %979
  %983 = vrot.lane.b32.xlu0 %v969, 112
  %v984 = vpop.permute.xlu0 %983
  %985 = vrot.lane.b32.xlu0 %v972, 112
  %v986 = vpop.permute.xlu0 %985
  %989 = vrot.lane.b32.xlu0 %v969, 104
  %v990 = vpop.permute.xlu0 %989
  %991 = vrot.lane.b32.xlu0 %v972, 104
  %v992 = vpop.permute.xlu0 %991
  %v995 = vpack.c.bf16 %v972, %v969
  %v996 = vpack.c.bf16 %v980, %v978
  %v997 = vpack.c.bf16 %v986, %v984
  %v998 = vpack.c.bf16 %v992, %v990
  %999 = vrot.lane.b32.xlu0 %v969, 96
  %v1000 = vpop.permute.xlu0 %999
  %1001 = vrot.lane.b32.xlu0 %v972, 96
  %v1002 = vpop.permute.xlu0 %1001
  %1003 = vrot.lane.b32.xlu0 %v978, 96
  %v1004 = vpop.permute.xlu0 %1003
  %1005 = vrot.lane.b32.xlu0 %v980, 96
  %v1006 = vpop.permute.xlu0 %1005
  %1007 = vrot.lane.b32.xlu0 %v984, 96
  %v1008 = vpop.permute.xlu0 %1007
  %1009 = vrot.lane.b32.xlu0 %v986, 96
  %v1010 = vpop.permute.xlu0 %1009
  %1011 = vrot.lane.b32.xlu0 %v990, 96
  %v1012 = vpop.permute.xlu0 %1011
  %1013 = vrot.lane.b32.xlu0 %v992, 96
  %v1014 = vpop.permute.xlu0 %1013
  %1023 = vxpose.xlu0.b32.start [1/16] %v1000, 128
  %1024 = vxpose.xlu0.b32.cont [2/16] %v1002, 128
  %1025 = vxpose.xlu0.b32.cont [3/16] %v1004, 128
  %1026 = vxpose.xlu0.b32.cont [4/16] %v1006, 128
  %1027 = vxpose.xlu0.b32.cont [5/16] %v1008, 128
  %1028 = vxpose.xlu0.b32.cont [6/16] %v1010, 128
  %1029 = vxpose.xlu0.b32.cont [7/16] %v1012, 128
  %1030 = vxpose.xlu0.b32.cont [8/16] %v1014, 128
  %1031 = vxpose.xlu0.b32.cont [9/16] 0.0, 128
  %1032 = vxpose.xlu0.b32.cont [10/16] 0.0, 128
  %1033 = vxpose.xlu0.b32.cont [11/16] 0.0, 128
  %1034 = vxpose.xlu0.b32.cont [12/16] 0.0, 128
  %1035 = vxpose.xlu0.b32.cont [13/16] 0.0, 128
  %1036 = vxpose.xlu0.b32.cont [14/16] 0.0, 128
  %1037 = vxpose.xlu0.b32.cont [15/16] 0.0, 128
  %1038 = vxpose.xlu0.b32.end [16/16] 0.0, 128
  %v1039 = vpop.trf.xlu0
  %v1040 = vpop.trf.xlu0
  %v1041 = vpop.trf.xlu0
  %v1042 = vpop.trf.xlu0
  %v1043 = vpop.trf.xlu0
  %v1044 = vpop.trf.xlu0
  %v1045 = vpop.trf.xlu0
  %v1046 = vpop.trf.xlu0
  %v1047 = vpop.trf.xlu0
  %v1048 = vpop.trf.xlu0
  %v1049 = vpop.trf.xlu0
  %v1050 = vpop.trf.xlu0
  %v1051 = vpop.trf.xlu0
  %v1052 = vpop.trf.xlu0
  %v1053 = vpop.trf.xlu0
  %v1054 = vpop.trf.xlu0
  %v1055 = vpack.c.bf16 %v1039, %v1039
  %v1057 = vsel %vm294, %v995, 0
  %v1060 = vsel %vm294, %v996, 0
  %v1063 = vsel %vm294, %v997, 0
  %v1066 = vsel %vm294, %v998, 0
  %v1069 = vsel %vm307, %v1055, 0
  %1071 = vmatprep.subr.bf16.mxu0 0
  %1072 = vmatpush1.bf16.msra.mxu0 %v1069
  %1073 = vmatprep.subr.bf16.mxu0 0
  %1074 = vmatpush1.bf16.msra.mxu0 0
  %1075 = vmatprep.subr.bf16.mxu0 0
  %1076 = vmatpush1.bf16.msra.mxu0 0
  %1077 = vmatprep.subr.bf16.mxu0 0
  %1078 = vmatpush1.bf16.msra.mxu0 0
  %1079 = vmatprep.subr.bf16.mxu0 0
  %1080 = vmatpush1.bf16.msra.mxu0 0
  %1081 = vmatprep.subr.bf16.mxu0 0
  %1082 = vmatpush1.bf16.msra.mxu0 0
  %1083 = vmatprep.subr.bf16.mxu0 0
  %1084 = vmatpush1.bf16.msra.mxu0 0
  %1085 = vmatprep.subr.bf16.mxu0 0
  %1086 = vmatpush1.bf16.msra.mxu0 0
  %1087 = vmatprep.subr.bf16.mxu0 0
  %1088 = vmatpush1.bf16.msra.mxu0 0
  %1089 = vmatprep.subr.bf16.mxu0 0
  %1090 = vmatpush1.bf16.msra.mxu0 0
  %1091 = vmatprep.subr.bf16.mxu0 0
  %1092 = vmatpush1.bf16.msra.mxu0 0
  %1093 = vmatprep.subr.bf16.mxu0 0
  %1094 = vmatpush1.bf16.msra.mxu0 0
  %1095 = vmatprep.subr.bf16.mxu0 0
  %1096 = vmatpush1.bf16.msra.mxu0 0
  %1097 = vmatprep.subr.bf16.mxu0 0
  %1098 = vmatpush1.bf16.msra.mxu0 0
  %1099 = vmatprep.subr.bf16.mxu0 0
  %1100 = vmatpush1.bf16.msra.mxu0 0
  %1101 = vmatprep.subr.bf16.mxu0 0
  %1102 = vmatpush1.bf16.msra.mxu0 0
  %1103 = vmatprep.mubr.bf16.mxu0 0
  %1104 = vmatmul.mubr.bf16.gmra.mrb[0].mxu0 %v1057
  %v1105 = vpop.f32.mrb[0].mxu0
  %v1106 = vadd.f32 %v18, %v1105
  %v1107 = vpop.f32.mrb[0].mxu0
  %v1108 = vpop.f32.mrb[0].mxu0
  %v1109 = vadd.f32 %v19, %v1108
  %v1110 = vpop.f32.mrb[0].mxu0
  %1111 = vmatprep.mubr.bf16.mxu0 0
  %1112 = vmatmul.mubr.bf16.gmra.mrb[0].mxu0 %v1060
  %v1113 = vpop.f32.mrb[0].mxu0
  %v1114 = vadd.f32 %v20, %v1113
  %v1115 = vpop.f32.mrb[0].mxu0
  %v1116 = vpop.f32.mrb[0].mxu0
  %v1117 = vadd.f32 %v21, %v1116
  %v1118 = vpop.f32.mrb[0].mxu0
  %1119 = vmatprep.mubr.bf16.mxu0 0
  %1120 = vmatmul.mubr.bf16.gmra.mrb[0].mxu0 %v1063
  %v1121 = vpop.f32.mrb[0].mxu0
  %v1122 = vadd.f32 %v22, %v1121
  %v1123 = vpop.f32.mrb[0].mxu0
  %v1124 = vpop.f32.mrb[0].mxu0
  %v1125 = vadd.f32 %v23, %v1124
  %v1126 = vpop.f32.mrb[0].mxu0
  %1127 = vmatprep.mubr.bf16.mxu0 0
  %1128 = vmatmul.mubr.bf16.gmra.mrb[0].mxu0 %v1066
  %v1129 = vpop.f32.mrb[0].mxu0
  %v1130 = vadd.f32 %v24, %v1129
  %v1131 = vpop.f32.mrb[0].mxu0
  %v1132 = vpop.f32.mrb[0].mxu0
  %v1133 = vadd.f32 %v25, %v1132
  %v1134 = vpop.f32.mrb[0].mxu0
  %1135 = vdwg.mxu0
  %v1136 = vsel %vm60, %v1106, -inf
  %1137 = vmax.xlane.f32.xlu0 %v1136
  %v1138 = vpop.xlane.xlu0 %1137
  %v1139 = vsel %vm60, %v1109, -inf
  %1140 = vmax.xlane.f32.xlu0 %v1139
  %v1141 = vpop.xlane.xlu0 %1140
  %v1142 = vsel %vm60, %v1114, -inf
  %1143 = vmax.xlane.f32.xlu0 %v1142
  %v1144 = vpop.xlane.xlu0 %1143
  %v1145 = vsel %vm60, %v1117, -inf
  %1146 = vmax.xlane.f32.xlu0 %v1145
  %v1147 = vpop.xlane.xlu0 %1146
  %v1148 = vsel %vm60, %v1122, -inf
  %1149 = vmax.xlane.f32.xlu0 %v1148
  %v1150 = vpop.xlane.xlu0 %1149
  %v1151 = vsel %vm60, %v1125, -inf
  %1152 = vmax.xlane.f32.xlu0 %v1151
  %v1153 = vpop.xlane.xlu0 %1152
  %v1154 = vsel %vm60, %v1130, -inf
  %1155 = vmax.xlane.f32.xlu0 %v1154
  %v1156 = vpop.xlane.xlu0 %1155
  %v1157 = vsel %vm60, %v1133, -inf
  %1158 = vmax.xlane.f32.xlu0 %v1157
  %v1159 = vpop.xlane.xlu0 %1158
  %v1160 = vsub.f32 %v1106, %v1138
  %v1161 = vsub.f32 %v1109, %v1141
  %v1162 = vsub.f32 %v1114, %v1144
  %v1163 = vsub.f32 %v1117, %v1147
  %v1164 = vsub.f32 %v1122, %v1150
  %v1165 = vsub.f32 %v1125, %v1153
  %v1166 = vsub.f32 %v1130, %v1156
  %v1167 = vsub.f32 %v1133, %v1159
  %v1168 = vmul.f32 %v1160, 1.442695
  %v1169 = vpow.pop %v1168
  %v1170 = vmul.f32 %v1161, 1.442695
  %v1171 = vpow.pop %v1170
  %v1172 = vmul.f32 %v1162, 1.442695
  %v1173 = vpow.pop %v1172
  %v1174 = vmul.f32 %v1163, 1.442695
  %v1175 = vpow.pop %v1174
  %v1176 = vmul.f32 %v1164, 1.442695
  %v1177 = vpow.pop %v1176
  %v1178 = vmul.f32 %v1165, 1.442695
  %v1179 = vpow.pop %v1178
  %v1180 = vmul.f32 %v1166, 1.442695
  %v1181 = vpow.pop %v1180
  %v1182 = vmul.f32 %v1167, 1.442695
  %v1183 = vpow.pop %v1182
  %v1184 = vsel %vm60, %v1169, 0.0
  %1185 = vadd.xlane.f32.xlu0 %v1184
  %v1186 = vpop.xlane.xlu0 %1185
  %v1187 = vsel %vm60, %v1171, 0.0
  %1188 = vadd.xlane.f32.xlu0 %v1187
  %v1189 = vpop.xlane.xlu0 %1188
  %v1190 = vsel %vm60, %v1173, 0.0
  %1191 = vadd.xlane.f32.xlu0 %v1190
  %v1192 = vpop.xlane.xlu0 %1191
  %v1193 = vsel %vm60, %v1175, 0.0
  %1194 = vadd.xlane.f32.xlu0 %v1193
  %v1195 = vpop.xlane.xlu0 %1194
  %v1196 = vsel %vm60, %v1177, 0.0
  %1197 = vadd.xlane.f32.xlu0 %v1196
  %v1198 = vpop.xlane.xlu0 %1197
  %v1199 = vsel %vm60, %v1179, 0.0
  %1200 = vadd.xlane.f32.xlu0 %v1199
  %v1201 = vpop.xlane.xlu0 %1200
  %v1202 = vsel %vm60, %v1181, 0.0
  %1203 = vadd.xlane.f32.xlu0 %v1202
  %v1204 = vpop.xlane.xlu0 %1203
  %v1205 = vsel %vm60, %v1183, 0.0
  %1206 = vadd.xlane.f32.xlu0 %v1205
  %v1207 = vpop.xlane.xlu0 %1206
  %v1208 = vrcp.pop %v1186
  %v1209 = vrcp.pop %v1189
  %v1210 = vrcp.pop %v1192
  %v1211 = vrcp.pop %v1195
  %v1212 = vrcp.pop %v1198
  %v1213 = vrcp.pop %v1201
  %v1214 = vrcp.pop %v1204
  %v1215 = vrcp.pop %v1207
  %v1216 = vmul.f32 %v1169, %v1208
  %v1217 = vmul.f32 %v1171, %v1209
  %v1218 = vmul.f32 %v1173, %v1210
  %v1219 = vmul.f32 %v1175, %v1211
  %v1220 = vmul.f32 %v1177, %v1212
  %v1221 = vmul.f32 %v1179, %v1213
  %v1222 = vmul.f32 %v1181, %v1214
  %v1223 = vmul.f32 %v1183, %v1215
  %v1224 = vpack.c.bf16 %v1217, %v1216
  %v1225 = vpack.c.bf16 %v1219, %v1218
  %v1226 = vpack.c.bf16 %v1221, %v1220
  %v1227 = vpack.c.bf16 %v1223, %v1222
  %1232 = vrot.lane.b32.xlu0 %v995, 64
  %v1233 = vpop.permute.xlu0 %1232
  %1234 = vrot.lane.b32.xlu0 %v996, 64
  %v1235 = vpop.permute.xlu0 %1234
  %1236 = vrot.lane.b32.xlu0 %v997, 64
  %v1237 = vpop.permute.xlu0 %1236
  %1238 = vrot.lane.b32.xlu0 %v998, 64
  %v1239 = vpop.permute.xlu0 %1238
  %v1245 = vsel %vm60, %v1224, 0
  %v1248 = vsel %vm60, %v1225, 0
  %v1251 = vsel %vm60, %v1226, 0
  %v1254 = vsel %vm60, %v1227, 0
  %1256 = vmatprep.subr.bf16.mxu0 0
  %1257 = vmatpush1.bf16.msra.mxu0 %v1233
  %1258 = vmatprep.subr.bf16.mxu0 0
  %1259 = vmatpush1.bf16.msra.mxu0 %v1235
  %1260 = vmatprep.subr.bf16.mxu0 0
  %1261 = vmatpush1.bf16.msra.mxu0 %v1237
  %1262 = vmatprep.subr.bf16.mxu0 0
  %1263 = vmatpush1.bf16.msra.mxu0 %v1239
  %1264 = vmatprep.subr.bf16.mxu0 0
  %1265 = vmatpush1.bf16.msra.mxu0 0
  %1266 = vmatprep.subr.bf16.mxu0 0
  %1267 = vmatpush1.bf16.msra.mxu0 0
  %1268 = vmatprep.subr.bf16.mxu0 0
  %1269 = vmatpush1.bf16.msra.mxu0 0
  %1270 = vmatprep.subr.bf16.mxu0 0
  %1271 = vmatpush1.bf16.msra.mxu0 0
  %1272 = vmatprep.subr.bf16.mxu0 0
  %1273 = vmatpush1.bf16.msra.mxu0 0
  %1274 = vmatprep.subr.bf16.mxu0 0
  %1275 = vmatpush1.bf16.msra.mxu0 0
  %1276 = vmatprep.subr.bf16.mxu0 0
  %1277 = vmatpush1.bf16.msra.mxu0 0
  %1278 = vmatprep.subr.bf16.mxu0 0
  %1279 = vmatpush1.bf16.msra.mxu0 0
  %1280 = vmatprep.subr.bf16.mxu0 0
  %1281 = vmatpush1.bf16.msra.mxu0 0
  %1282 = vmatprep.subr.bf16.mxu0 0
  %1283 = vmatpush1.bf16.msra.mxu0 0
  %1284 = vmatprep.subr.bf16.mxu0 0
  %1285 = vmatpush1.bf16.msra.mxu0 0
  %1286 = vmatprep.subr.bf16.mxu0 0
  %1287 = vmatpush1.bf16.msra.mxu0 0
  %1288 = vmatprep.mubr.bf16.mxu0 0
  %1289 = vmatmul.mubr.bf16.gmra.mrb[0].mxu0 %v1245
  %v1290 = vpop.f32.mrb[0].mxu0
  %v1291 = vadd.f32 0.0, %v1290
  %v1292 = vpop.f32.mrb[0].mxu0
  %v1293 = vpop.f32.mrb[0].mxu0
  %v1294 = vadd.f32 0.0, %v1293
  %v1295 = vpop.f32.mrb[0].mxu0
  %1296 = vmatprep.mubr.bf16.mxu0 0
  %1297 = vmatmul.mubr.bf16.gmra.mrb[0].mxu0 %v1248
  %v1298 = vpop.f32.mrb[0].mxu0
  %v1299 = vadd.f32 0.0, %v1298
  %v1300 = vpop.f32.mrb[0].mxu0
  %v1301 = vpop.f32.mrb[0].mxu0
  %v1302 = vadd.f32 0.0, %v1301
  %v1303 = vpop.f32.mrb[0].mxu0
  %1304 = vmatprep.mubr.bf16.mxu0 0
  %1305 = vmatmul.mubr.bf16.gmra.mrb[0].mxu0 %v1251
  %v1306 = vpop.f32.mrb[0].mxu0
  %v1307 = vadd.f32 0.0, %v1306
  %v1308 = vpop.f32.mrb[0].mxu0
  %v1309 = vpop.f32.mrb[0].mxu0
  %v1310 = vadd.f32 0.0, %v1309
  %v1311 = vpop.f32.mrb[0].mxu0
  %1312 = vmatprep.mubr.bf16.mxu0 0
  %1313 = vmatmul.mubr.bf16.gmra.mrb[0].mxu0 %v1254
  %v1314 = vpop.f32.mrb[0].mxu0
  %v1315 = vadd.f32 0.0, %v1314
  %v1316 = vpop.f32.mrb[0].mxu0
  %v1317 = vpop.f32.mrb[0].mxu0
  %v1318 = vadd.f32 0.0, %v1317
  %v1319 = vpop.f32.mrb[0].mxu0
  %1320 = vdwg.mxu0
  %1323 = vrot.lane.b32.xlu0 %v1299, 8
  %v1324 = vpop.permute.xlu0 %1323
  %1325 = vrot.lane.b32.xlu0 %v1302, 8
  %v1326 = vpop.permute.xlu0 %1325
  %1331 = vrot.lane.b32.xlu0 %v1307, 16
  %v1332 = vpop.permute.xlu0 %1331
  %1333 = vrot.lane.b32.xlu0 %v1310, 16
  %v1334 = vpop.permute.xlu0 %1333
  %1339 = vrot.lane.b32.xlu0 %v1315, 24
  %v1340 = vpop.permute.xlu0 %1339
  %1341 = vrot.lane.b32.xlu0 %v1318, 24
  %v1342 = vpop.permute.xlu0 %1341
  %v1345 = vsel %vm294, %v1291, %v1324
  %v1346 = vsel %vm294, %v1294, %v1326
  %v1347 = vsel %vm587, %v1345, %v1332
  %v1348 = vsel %vm587, %v1346, %v1334
  %v1349 = vsel %vm590, %v1347, %v1340
  %v1350 = vsel %vm590, %v1348, %v1342
  %v1351 = vpack.c.bf16 %v1350, %v1349
  %v1352 = vld [vmem:[%s1 + $0x80] sm:$0xf]
  %v1353 = vld [vmem:[%s1 + $0x84] sm:$0xf]
  %v1354 = vld [vmem:[%s1 + $0x88] sm:$0xf]
  %v1355 = vld [vmem:[%s1 + $0x8c] sm:$0xf]
  %v1356 = vld [vmem:[%s2 + $0x1b] sm:$0x1]
  %v1357 = vlaneseq
  %v1358 = vshrl.u32 %v1357, 7
  %v1359 = vsub.s32 0, %v1358
  %v1360 = vrot.slane %v1356, %v1359
  %v1365 = vunpack.c.l.b16 %v1352
  %v1366 = vunpack.c.l.b16 %v1353
  %v1367 = vunpack.c.l.b16 %v1354
  %v1368 = vunpack.c.l.b16 %v1355
  %v1369 = vpack.c.b16 %v1366, %v1365
  %v1370 = vpack.c.b16 %v1368, %v1367
  %v1374 = vsel %vm107, %v1351, 0
  %1376 = vmatprep.subr.bf16.mxu0 0
  %1377 = vmatpush1.bf16.msra.mxu0 %v1369
  %1378 = vmatprep.subr.bf16.mxu0 0
  %1379 = vmatpush1.bf16.msra.mxu0 %v1370
  %1380 = vmatprep.subr.bf16.mxu0 0
  %1381 = vmatpush1.bf16.msra.mxu0 0
  %1382 = vmatprep.subr.bf16.mxu0 0
  %1383 = vmatpush1.bf16.msra.mxu0 0
  %1384 = vmatprep.subr.bf16.mxu0 0
  %1385 = vmatpush1.bf16.msra.mxu0 0
  %1386 = vmatprep.subr.bf16.mxu0 0
  %1387 = vmatpush1.bf16.msra.mxu0 0
  %1388 = vmatprep.subr.bf16.mxu0 0
  %1389 = vmatpush1.bf16.msra.mxu0 0
  %1390 = vmatprep.subr.bf16.mxu0 0
  %1391 = vmatpush1.bf16.msra.mxu0 0
  %1392 = vmatprep.subr.bf16.mxu0 0
  %1393 = vmatpush1.bf16.msra.mxu0 0
  %1394 = vmatprep.subr.bf16.mxu0 0
  %1395 = vmatpush1.bf16.msra.mxu0 0
  %1396 = vmatprep.subr.bf16.mxu0 0
  %1397 = vmatpush1.bf16.msra.mxu0 0
  %1398 = vmatprep.subr.bf16.mxu0 0
  %1399 = vmatpush1.bf16.msra.mxu0 0
  %1400 = vmatprep.subr.bf16.mxu0 0
  %1401 = vmatpush1.bf16.msra.mxu0 0
  %1402 = vmatprep.subr.bf16.mxu0 0
  %1403 = vmatpush1.bf16.msra.mxu0 0
  %1404 = vmatprep.subr.bf16.mxu0 0
  %1405 = vmatpush1.bf16.msra.mxu0 0
  %1406 = vmatprep.subr.bf16.mxu0 0
  %1407 = vmatpush1.bf16.msra.mxu0 0
  %1408 = vmatprep.mubr.bf16.mxu0 0
  %1409 = vmatmul.mubr.bf16.gmra.mrb[0].mxu0 %v1374
  %v1410 = vpop.f32.mrb[0].mxu0
  %v1411 = vadd.f32 %v1360, %v1410
  %v1412 = vpop.f32.mrb[0].mxu0
  %v1413 = vpop.f32.mrb[0].mxu0
  %v1414 = vadd.f32 %v1360, %v1413
  %v1415 = vpop.f32.mrb[0].mxu0
  %1416 = vdwg.mxu0
  %v1417 = vadd.f32 %v907, %v1411
  %v1418 = vadd.f32 %v908, %v1414
  %v1419 = vld [vmem:[%s2 + $0x1c] sm:$0x1]
  %v1420 = vld [vmem:[%s2 + $0x1d] sm:$0x1]
  %v1421 = vsel %vm107, %v1417, 0.0
  %1422 = vadd.xlane.f32.xlu0 %v1421
  %v1423 = vpop.xlane.xlu0 %1422
  %v1424 = vsel %vm107, %v1418, 0.0
  %1425 = vadd.xlane.f32.xlu0 %v1424
  %v1426 = vpop.xlane.xlu0 %1425
  %v1427 = vmul.f32 %v1423, %v114
  %v1428 = vmul.f32 %v1426, %v114
  %v1429 = vsub.f32 %v1417, %v1427
  %v1430 = vsub.f32 %v1418, %v1428
  %v1431 = vmul.f32 %v1429, %v1429
  %v1432 = vmul.f32 %v1430, %v1430
  %v1433 = vsel %vm107, %v1431, 0.0
  %1434 = vadd.xlane.f32.xlu0 %v1433
  %v1435 = vpop.xlane.xlu0 %1434
  %v1436 = vsel %vm107, %v1432, 0.0
  %1437 = vadd.xlane.f32.xlu0 %v1436
  %v1438 = vpop.xlane.xlu0 %1437
  %v1439 = vmul.f32 %v1435, %v114
  %v1440 = vmul.f32 %v1438, %v114
  %v1441 = vadd.f32 %v1439, 1e-12
  %v1442 = vadd.f32 %v1440, 1e-12
  %v1443 = vrsqrt.pop %v1441
  %v1444 = vrsqrt.pop %v1442
  %v1445 = vmul.f32 %v1429, %v1443
  %v1446 = vmul.f32 %v1430, %v1444
  %v1447 = vlaneseq
  %v1448 = vshrl.u32 %v1447, 7
  %v1449 = vsub.s32 0, %v1448
  %v1450 = vrot.slane %v1419, %v1449
  %v1451 = vmul.f32 %v1445, %v1450
  %v1452 = vmul.f32 %v1446, %v1450
  %v1453 = vlaneseq
  %v1454 = vshrl.u32 %v1453, 7
  %v1455 = vsub.s32 0, %v1454
  %v1456 = vrot.slane %v1420, %v1455
  %v1457 = vadd.f32 %v1451, %v1456
  %v1458 = vadd.f32 %v1452, %v1456
  %v1459 = vpack.c.bf16 %v1458, %v1457
  %v1460 = vld [vmem:[%s1 + $0x90] sm:$0xf]
  %v1461 = vld [vmem:[%s1 + $0x94] sm:$0xf]
  %v1462 = vld [vmem:[%s1 + $0x98] sm:$0xf]
  %v1463 = vld [vmem:[%s1 + $0x9c] sm:$0xf]
  %v1464 = vld [vmem:[%s2 + $0x1e] sm:$0x1]
  %v1465 = vlaneseq
  %v1466 = vshrl.u32 %v1465, 7
  %v1467 = vsub.s32 0, %v1466
  %v1468 = vrot.slane %v1464, %v1467
  %v1473 = vunpack.c.l.b16 %v1460
  %v1474 = vunpack.c.l.b16 %v1461
  %v1475 = vunpack.c.l.b16 %v1462
  %v1476 = vunpack.c.l.b16 %v1463
  %v1477 = vpack.c.b16 %v1474, %v1473
  %v1478 = vpack.c.b16 %v1476, %v1475
  %v1482 = vsel %vm107, %v1459, 0
  %1484 = vmatprep.subr.bf16.mxu0 0
  %1485 = vmatpush1.bf16.msra.mxu0 %v1477
  %1486 = vmatprep.subr.bf16.mxu0 0
  %1487 = vmatpush1.bf16.msra.mxu0 %v1478
  %1488 = vmatprep.subr.bf16.mxu0 0
  %1489 = vmatpush1.bf16.msra.mxu0 0
  %1490 = vmatprep.subr.bf16.mxu0 0
  %1491 = vmatpush1.bf16.msra.mxu0 0
  %1492 = vmatprep.subr.bf16.mxu0 0
  %1493 = vmatpush1.bf16.msra.mxu0 0
  %1494 = vmatprep.subr.bf16.mxu0 0
  %1495 = vmatpush1.bf16.msra.mxu0 0
  %1496 = vmatprep.subr.bf16.mxu0 0
  %1497 = vmatpush1.bf16.msra.mxu0 0
  %1498 = vmatprep.subr.bf16.mxu0 0
  %1499 = vmatpush1.bf16.msra.mxu0 0
  %1500 = vmatprep.subr.bf16.mxu0 0
  %1501 = vmatpush1.bf16.msra.mxu0 0
  %1502 = vmatprep.subr.bf16.mxu0 0
  %1503 = vmatpush1.bf16.msra.mxu0 0
  %1504 = vmatprep.subr.bf16.mxu0 0
  %1505 = vmatpush1.bf16.msra.mxu0 0
  %1506 = vmatprep.subr.bf16.mxu0 0
  %1507 = vmatpush1.bf16.msra.mxu0 0
  %1508 = vmatprep.subr.bf16.mxu0 0
  %1509 = vmatpush1.bf16.msra.mxu0 0
  %1510 = vmatprep.subr.bf16.mxu0 0
  %1511 = vmatpush1.bf16.msra.mxu0 0
  %1512 = vmatprep.subr.bf16.mxu0 0
  %1513 = vmatpush1.bf16.msra.mxu0 0
  %1514 = vmatprep.subr.bf16.mxu0 0
  %1515 = vmatpush1.bf16.msra.mxu0 0
  %1516 = vmatprep.mubr.bf16.mxu0 0
  %1517 = vmatmul.mubr.bf16.gmra.mrb[0].mxu0 %v1482
  %v1518 = vpop.f32.mrb[0].mxu0
  %v1519 = vadd.f32 %v1468, %v1518
  %v1520 = vpop.f32.mrb[0].mxu0
  %v1521 = vpop.f32.mrb[0].mxu0
  %v1522 = vadd.f32 %v1468, %v1521
  %v1523 = vpop.f32.mrb[0].mxu0
  %1524 = vdwg.mxu0
  %v1525 = vmul.f32 %v1519, 0.5
  %v1526 = vmul.f32 %v1522, 0.5
  %v1527 = vmul.f32 %v1519, %v1519
  %v1528 = vmul.f32 %v1522, %v1522
  %v1529 = vmul.f32 %v1519, %v1527
  %v1530 = vmul.f32 %v1522, %v1528
  %v1531 = vmul.f32 %v1529, 0.044715
  %v1532 = vmul.f32 %v1530, 0.044715
  %v1533 = vadd.f32 %v1519, %v1531
  %v1534 = vadd.f32 %v1522, %v1532
  %v1535 = vmul.f32 %v1533, 0.7978846
  %v1536 = vmul.f32 %v1534, 0.7978846
  %v1537 = vtanh.pop %v1535
  %v1538 = vtanh.pop %v1536
  %v1539 = vadd.f32 %v1537, 1.0
  %v1540 = vadd.f32 %v1538, 1.0
  %v1541 = vmul.f32 %v1525, %v1539
  %v1542 = vmul.f32 %v1526, %v1540
  %v1543 = vpack.c.bf16 %v1542, %v1541
  %v1544 = vld [vmem:[%s1 + $0xa0] sm:$0xf]
  %v1545 = vld [vmem:[%s1 + $0xa4] sm:$0xf]
  %v1546 = vld [vmem:[%s1 + $0xa8] sm:$0xf]
  %v1547 = vld [vmem:[%s1 + $0xac] sm:$0xf]
  %v1548 = vld [vmem:[%s1 + $0xb0] sm:$0xf]
  %v1549 = vld [vmem:[%s1 + $0xb4] sm:$0xf]
  %v1550 = vld [vmem:[%s1 + $0xb8] sm:$0xf]
  %v1551 = vld [vmem:[%s1 + $0xbc] sm:$0xf]
  %v1552 = vld [vmem:[%s2 + $0x1f] sm:$0x1]
  %v1553 = vlaneseq
  %v1554 = vshrl.u32 %v1553, 7
  %v1555 = vsub.s32 0, %v1554
  %v1556 = vrot.slane %v1552, %v1555
  %v1565 = vunpack.c.l.b16 %v1544
  %v1566 = vunpack.c.l.b16 %v1545
  %v1567 = vunpack.c.l.b16 %v1546
  %v1568 = vunpack.c.l.b16 %v1547
  %v1569 = vunpack.c.l.b16 %v1548
  %v1570 = vunpack.c.l.b16 %v1549
  %v1571 = vunpack.c.l.b16 %v1550
  %v1572 = vunpack.c.l.b16 %v1551
  %v1573 = vpack.c.b16 %v1566, %v1565
  %v1574 = vpack.c.b16 %v1568, %v1567
  %v1575 = vpack.c.b16 %v1570, %v1569
  %v1576 = vpack.c.b16 %v1572, %v1571
  %v1582 = vsel %vm60, %v1543, 0
  %1584 = vmatprep.subr.bf16.mxu0 0
  %1585 = vmatpush1.bf16.msra.mxu0 %v1573
  %1586 = vmatprep.subr.bf16.mxu0 0
  %1587 = vmatpush1.bf16.msra.mxu0 %v1574
  %1588 = vmatprep.subr.bf16.mxu0 0
  %1589 = vmatpush1.bf16.msra.mxu0 %v1575
  %1590 = vmatprep.subr.bf16.mxu0 0
  %1591 = vmatpush1.bf16.msra.mxu0 %v1576
  %1592 = vmatprep.subr.bf16.mxu0 0
  %1593 = vmatpush1.bf16.msra.mxu0 0
  %1594 = vmatprep.subr.bf16.mxu0 0
  %1595 = vmatpush1.bf16.msra.mxu0 0
  %1596 = vmatprep.subr.bf16.mxu0 0
  %1597 = vmatpush1.bf16.msra.mxu0 0
  %1598 = vmatprep.subr.bf16.mxu0 0
  %1599 = vmatpush1.bf16.msra.mxu0 0
  %1600 = vmatprep.subr.bf16.mxu0 0
  %1601 = vmatpush1.bf16.msra.mxu0 0
  %1602 = vmatprep.subr.bf16.mxu0 0
  %1603 = vmatpush1.bf16.msra.mxu0 0
  %1604 = vmatprep.subr.bf16.mxu0 0
  %1605 = vmatpush1.bf16.msra.mxu0 0
  %1606 = vmatprep.subr.bf16.mxu0 0
  %1607 = vmatpush1.bf16.msra.mxu0 0
  %1608 = vmatprep.subr.bf16.mxu0 0
  %1609 = vmatpush1.bf16.msra.mxu0 0
  %1610 = vmatprep.subr.bf16.mxu0 0
  %1611 = vmatpush1.bf16.msra.mxu0 0
  %1612 = vmatprep.subr.bf16.mxu0 0
  %1613 = vmatpush1.bf16.msra.mxu0 0
  %1614 = vmatprep.subr.bf16.mxu0 0
  %1615 = vmatpush1.bf16.msra.mxu0 0
  %1616 = vmatprep.mubr.bf16.mxu0 0
  %1617 = vmatmul.mubr.bf16.gmra.mrb[0].mxu0 %v1582
  %v1618 = vpop.f32.mrb[0].mxu0
  %v1619 = vadd.f32 %v1556, %v1618
  %v1620 = vpop.f32.mrb[0].mxu0
  %v1621 = vpop.f32.mrb[0].mxu0
  %v1622 = vadd.f32 %v1556, %v1621
  %v1623 = vpop.f32.mrb[0].mxu0
  %1624 = vdwg.mxu0
  %v1625 = vadd.f32 %v1457, %v1619
  %v1626 = vadd.f32 %v1458, %v1622
  %v1627 = vld [vmem:[%s2 + $0x20] sm:$0x1]
  %v1628 = vld [vmem:[%s2 + $0x21] sm:$0x1]
  %v1629 = vsel %vm107, %v1625, 0.0
  %1630 = vadd.xlane.f32.xlu0 %v1629
  %v1631 = vpop.xlane.xlu0 %1630
  %v1632 = vsel %vm107, %v1626, 0.0
  %1633 = vadd.xlane.f32.xlu0 %v1632
  %v1634 = vpop.xlane.xlu0 %1633
  %v1635 = vmul.f32 %v1631, %v114
  %v1636 = vmul.f32 %v1634, %v114
  %v1637 = vsub.f32 %v1625, %v1635
  %v1638 = vsub.f32 %v1626, %v1636
  %v1639 = vmul.f32 %v1637, %v1637
  %v1640 = vmul.f32 %v1638, %v1638
  %v1641 = vsel %vm107, %v1639, 0.0
  %1642 = vadd.xlane.f32.xlu0 %v1641
  %v1643 = vpop.xlane.xlu0 %1642
  %v1644 = vsel %vm107, %v1640, 0.0
  %1645 = vadd.xlane.f32.xlu0 %v1644
  %v1646 = vpop.xlane.xlu0 %1645
  %v1647 = vmul.f32 %v1643, %v114
  %v1648 = vmul.f32 %v1646, %v114
  %v1649 = vadd.f32 %v1647, 1e-12
  %v1650 = vadd.f32 %v1648, 1e-12
  %v1651 = vrsqrt.pop %v1649
  %v1652 = vrsqrt.pop %v1650
  %v1653 = vmul.f32 %v1637, %v1651
  %v1654 = vmul.f32 %v1638, %v1652
  %v1655 = vlaneseq
  %v1656 = vshrl.u32 %v1655, 7
  %v1657 = vsub.s32 0, %v1656
  %v1658 = vrot.slane %v1627, %v1657
  %v1659 = vmul.f32 %v1653, %v1658
  %v1660 = vmul.f32 %v1654, %v1658
  %v1661 = vlaneseq
  %v1662 = vshrl.u32 %v1661, 7
  %v1663 = vsub.s32 0, %v1662
  %v1664 = vrot.slane %v1628, %v1663
  %v1665 = vadd.f32 %v1659, %v1664
  %v1666 = vadd.f32 %v1660, %v1664
  %v1667 = vld [vmem:[%s2 + $0x22] sm:$0x1]
  %v1668 = vld [vmem:[%s2 + $0x23] sm:$0x1]
  %v1669 = vlaneseq
  %v1670 = vshrl.u32 %v1669, 7
  %v1671 = vsub.s32 0, %v1670
  %v1672 = vrot.slane %v1667, %v1671
  %v1673 = vmul.f32 %v1665, %v1672
  %v1674 = vmul.f32 %v1666, %v1672
  %v1675 = vsel %vm107, %v1673, 0.0
  %1676 = vadd.xlane.f32.xlu0 %v1675
  %v1677 = vpop.xlane.xlu0 %1676
  %v1678 = vsel %vm107, %v1674, 0.0
  %1679 = vadd.xlane.f32.xlu0 %v1678
  %v1680 = vpop.xlane.xlu0 %1679
  %v1681 = vlaneseq
  %v1682 = vshrl.u32 %v1681, 7
  %v1683 = vsub.s32 0, %v1682
  %v1684 = vrot.slane %v1668, %v1683
  %v1685 = vadd.f32 %v1677, %v1684
  %v1686 = vadd.f32 %v1680, %v1684
  %v1687 = vsub.f32 0.0, %v1685
  %v1688 = vsub.f32 0.0, %v1686
  %v1689 = vmul.f32 %v1687, 1.442695
  %v1690 = vpow.pop %v1689
  %v1691 = vmul.f32 %v1688, 1.442695
  %v1692 = vpow.pop %v1691
  %v1693 = vadd.f32 %v1690, 1.0
  %v1694 = vadd.f32 %v1692, 1.0
  %v1695 = vrcp.pop %v1693
  %v1696 = vmul.f32 1.0, %v1695
  %v1697 = vrcp.pop %v1694
  %v1698 = vmul.f32 1.0, %v1697
  %vm1699 = vcmask 7168
  %1700 = vst.msk [vmem:[%s3] sm:$0xff] %vm1699, %v1696
  %1701 = vst.msk [vmem:[%s3 + $0x8] sm:$0xff] %vm1699, %v1698
  // Predicated region
  $region14: #{pairwise_forward.1} parent=0 // pred_check
    _
  $region15: #{pairwise_forward.1} parent=0 // pred_check_branch
    %1703 = sbr.rel (0) target = $region17
  $region16: #{pairwise_forward.1} parent=0 // pred_region
    _
  $region17: #{pairwise_forward.1} parent=0 // pred_fallthru
    _
  // Predicated region
  $region18: #{pairwise_forward.1} parent=0 // pred_check
    _
  $region19: #{pairwise_forward.1} parent=0 // pred_check_branch
    %1705 = sbr.rel (0) target = $region21
  $region20: #{pairwise_forward.1} parent=0 // pred_region
    _
  $region21: #{pairwise_forward.1} parent=0 // pred_fallthru
    _

</llo_original>
